<compile_context>
chip_gen: v6e
topology: v6e:2x2x1
jax: 0.10.0
libtpu: 0.0.40
codegen_flags: <defaults>
</compile_context>

<pallas_src>
import jax
import jax.numpy as jnp
from jax import lax
from jax.experimental import pallas as pl
from jax.experimental.pallas import tpu as pltpu


# ------------------------------ Pallas kernel ------------------------------ #

def _conv_block(a, g_ref, tw_ref, b_ref, *, relu):
    """One 4x4 / stride-2 / pad-1 conv (+bias, optional ReLU) on a 2-D slab.

    a      : (Bt*H, C*W) bf16     rows=(b,h), lanes=(c,w) c-major.
    g_ref  : (4, Bt*Ho, Bt*H)     one-hot row-gather mats (tap i -> row 2*oh+i-1).
    tw_ref : (4*C*W, Cout*Wo)     Toeplitz-packed weights (column taps folded in).
    b_ref  : (1, Cout*Wo)         lane-dense f32 bias.
    returns (Bt*Ho, Cout*Wo) bf16.
    """
    # 4 exact row-tap gathers (one-hot matmuls, K = Bt*H), then a 128-aligned
    # lane concat -> im2col slab with K = 4*C*W.
    taps = [
        jnp.dot(g_ref[i], a, preferred_element_type=jnp.float32).astype(a.dtype)
        for i in range(4)
    ]
    slab = jnp.concatenate(taps, axis=1)                       # (Bt*Ho, 4*C*W)
    # Single fat GEMM per layer: bf16 operands, f32 accumulation.
    out = jnp.dot(slab, tw_ref[...], preferred_element_type=jnp.float32)
    out = out + b_ref[...]
    if relu:
        out = jnp.maximum(out, 0.0)
    return out.astype(a.dtype)


def _encoder_kernel(x_ref, g1, tw1, b1, g2, tw2, b2, g3, tw3, b3,
                    w4, b4, o_ref):
    a = x_ref[...]                                             # (Bt*H,   Cp*W)
    a = _conv_block(a, g1, tw1, b1, relu=True)                 # (Bt*H/2, ch*W/2)
    a = _conv_block(a, g2, tw2, b2, relu=True)                 # (Bt*H/4, ch*W/4)
    a = _conv_block(a, g3, tw3, b3, relu=True)                 # (Bt*H/8, ch*W/8)
    out = jnp.dot(a, w4[...], preferred_element_type=jnp.float32) + b4[...]
    o_ref[...] = out.astype(o_ref.dtype)                       # (Bt*H/8, embed*W/8)


# --------------------------- wrapper-side repacks --------------------------- #

def _row_gather_mats(H, bt, dtype):
    """G[i, (b,oh), (b,h)] = 1 iff h == 2*oh + i - 1 (same b); OOB rows are zero."""
    Ho = H // 2
    i = jnp.arange(4)[:, None, None]
    r = jnp.arange(bt * Ho)[None, :, None]
    s = jnp.arange(bt * H)[None, None, :]
    b_out, oh = r // Ho, r % Ho
    b_in, h = s // H, s % H
    hit = (b_out == b_in) & (h == 2 * oh + i - 1)
    return hit.astype(dtype)                                   # (4, bt*Ho, bt*H)


def _toeplitz_weight(w, W, cin_pad, dtype):
    """OIHW (Cout,Cin,4,4) -> (4*cin_pad*W, Cout*Wo): column taps + padding folded."""
    cout, cin = w.shape[0], w.shape[1]
    Wo = W // 2
    w_pad = jnp.zeros((cout, cin_pad, 4, 4), w.dtype).at[:, :cin].set(w)
    j = jnp.arange(W)[:, None] - 2 * jnp.arange(Wo)[None, :] + 1     # (W, Wo)
    valid = (j >= 0) & (j < 4)
    t = w_pad[:, :, :, jnp.clip(j, 0, 3)]                            # (co,c,i,W,Wo)
    t = jnp.where(valid[None, None, None], t, 0.0)
    t = jnp.transpose(t, (2, 1, 3, 0, 4))                            # (i,c,w,co,ow)
    return t.reshape(4 * cin_pad * W, cout * Wo).astype(dtype)


def _final_mat(w4, W8, dtype):
    """1x1 conv as a GEMM on (c,w)-major lanes: M[(c,w),(co,w')] = w4[co,c]*d_ww'."""
    embed, ch = w4.shape
    eye = jnp.eye(W8, dtype=w4.dtype)
    m = jnp.einsum('oc,wv->cwov', w4, eye)                           # (c,w,co,w')
    return m.reshape(ch * W8, embed * W8).astype(dtype)


def _expand_bias(b, wo):
    return jnp.repeat(b, wo)[None, :].astype(jnp.float32)            # (1, Cout*Wo)


# --------------------------------- forward ---------------------------------- #

def encoder_forward(params, x, *, batch_tile=None, compute_dtype=jnp.bfloat16):
    """x: (N, Cin, H, W) float32 NCHW (PyTorch layout).  Returns NCHW output."""
    N, Cin, H, W = x.shape
    ch = params["w1"].shape[0]
    embed = params["w4"].shape[0]
    assert H % 8 == 0 and W % 8 == 0, "three stride-2 convs need H, W % 8 == 0"

    # Batch blocking: amortise per-step overhead, but keep grid >= 2 so both
    # v7x TensorCores stay busy (no-op on v5e/v6e).
    if batch_tile is None:
        batch_tile = 1
        if N > 2:
            for cand in (8, 4, 2):
                if N % cand == 0 and N // cand >= 2:
                    batch_tile = cand
                    break
    assert N % batch_tile == 0
    bt = batch_tile
    grid = N // bt

    cpad = -(-Cin // 8) * 8          # pad in-channels so per-tap lane groups align
    H2, W2 = H // 2, W // 2
    H4, W4 = H // 4, W // 4
    H8, W8 = H // 8, W // 8

    # ---- wrapper-side repacks (plain XLA, done once under jit) ----
    xp = x
    if cpad != Cin:
        xp = jnp.concatenate(
            [xp, jnp.zeros((N, cpad - Cin, H, W), x.dtype)], axis=1)
    # NCHW -> per-grid-step 2-D slabs: rows (b, h), lanes (c, w) c-major.
    xp = xp.transpose(0, 2, 1, 3).reshape(grid, bt * H, cpad * W).astype(compute_dtype)

    g1 = _row_gather_mats(H, bt, compute_dtype)
    g2 = _row_gather_mats(H2, bt, compute_dtype)
    g3 = _row_gather_mats(H4, bt, compute_dtype)

    tw1 = _toeplitz_weight(params["w1"], W, cpad, compute_dtype)
    tw2 = _toeplitz_weight(params["w2"], W2, ch, compute_dtype)
    tw3 = _toeplitz_weight(params["w3"], W4, ch, compute_dtype)
    w4m = _final_mat(params["w4"][:, :, 0, 0], W8, compute_dtype)

    b1e = _expand_bias(params["b1"], W2)
    b2e = _expand_bias(params["b2"], W4)
    b3e = _expand_bias(params["b3"], W8)
    b4e = _expand_bias(params["b4"], W8)

    ins = (xp, g1, tw1, b1e, g2, tw2, b2e, g3, tw3, b3e, w4m, b4e)

    def cspec(shape):
        zeros = (0,) * len(shape)
        return pl.BlockSpec(shape, lambda g, z=zeros: z,
                            pipeline_mode=pl.Buffered(1))   # constants: single buffer

    in_specs = [
        pl.BlockSpec((None, bt * H, cpad * W), lambda g: (g, 0, 0)),
        cspec(g1.shape), cspec(tw1.shape), cspec(b1e.shape),
        cspec(g2.shape), cspec(tw2.shape), cspec(b2e.shape),
        cspec(g3.shape), cspec(tw3.shape), cspec(b3e.shape),
        cspec(w4m.shape), cspec(b4e.shape),
    ]
    out_specs = pl.BlockSpec((None, bt * H8, embed * W8), lambda g: (g, 0, 0))
    out_shape = jax.ShapeDtypeStruct((grid, bt * H8, embed * W8), x.dtype)

    # Advisory cost estimate: row-gather matmuls + Toeplitz GEMMs + final 1x1.
    macs = 0
    for c, h, w in ((cpad, H, W), (ch, H2, W2), (ch, H4, W4)):
        ho, wo = h // 2, w // 2
        macs += 4 * (bt * ho) * (bt * h) * (c * w)           # row-gather matmuls
        macs += (bt * ho) * (4 * c * w) * (ch * wo)          # Toeplitz GEMM
    macs += (bt * H8) * (ch * W8) * (embed * W8)             # 1x1 conv GEMM
    macs *= grid
    in_bytes = sum(int(a.size) * a.dtype.itemsize for a in ins)
    out_bytes = grid * bt * H8 * embed * W8 * x.dtype.itemsize
    cost = pl.CostEstimate(flops=2 * macs, transcendentals=0,
                           bytes_accessed=in_bytes + out_bytes)

    # VMEM limit from the computed per-step footprint (+ generous headroom),
    # instead of a hardcoded physical-VMEM-sized number.
    step_bytes = (2 * (int(xp[0].size) * xp.dtype.itemsize
                       + bt * H8 * embed * W8 * x.dtype.itemsize)
                  + sum(int(a.size) * a.dtype.itemsize for a in ins[1:]))
    vmem_limit = int(min(48 << 20, max(16 << 20, 4 * step_bytes + (4 << 20))))

    out = pl.pallas_call(
        _encoder_kernel,
        out_shape=out_shape,
        grid=(grid,),
        in_specs=in_specs,
        out_specs=out_specs,
        compiler_params=pltpu.CompilerParams(
            dimension_semantics=("parallel",),
            vmem_limit_bytes=vmem_limit),
        cost_estimate=cost,
    )(*ins)

    # (grid, bt*H8, embed*W8) -> NCHW, all free wrapper-side reshapes.
    out = out.reshape(grid, bt, H8, embed, W8)
    out = out.transpose(0, 1, 3, 2, 4).reshape(N, embed, H8, W8)
    return out


# ---------------------------- pure-JAX reference ---------------------------- #

def _conv_ref(x, w, b, stride, padding):
    out = lax.conv_general_dilated(
        x, w, (stride, stride), ((padding, padding), (padding, padding)),
        dimension_numbers=("NCHW", "OIHW", "NCHW"))
    return out + b.reshape(1, -1, 1, 1)


def encoder_ref(params, x):
    x = jnp.maximum(_conv_ref(x, params["w1"], params["b1"], 2, 1), 0.0)
    x = jnp.maximum(_conv_ref(x, params["w2"], params["b2"], 2, 1), 0.0)
    x = jnp.maximum(_conv_ref(x, params["w3"], params["b3"], 2, 1), 0.0)
    return _conv_ref(x, params["w4"], params["b4"], 1, 0)


# ----------------------------------- main ----------------------------------- #

def make_params(key, in_channel, channel, embed_dim):
    ks = jax.random.split(key, 8)

    def winit(k, shape):
        return (0.05 * jax.random.normal(k, shape)).astype(jnp.float32)

    return {
        "w1": winit(ks[0], (channel, in_channel, 4, 4)),
        "b1": winit(ks[1], (channel,)),
        "w2": winit(ks[2], (channel, channel, 4, 4)),
        "b2": winit(ks[3], (channel,)),
        "w3": winit(ks[4], (channel, channel, 4, 4)),
        "b3": winit(ks[5], (channel,)),
        "w4": winit(ks[6], (embed_dim, channel, 1, 1)),
        "b4": winit(ks[7], (embed_dim,)),
    }


if __name__ == "__main__":
    in_channel, channel, embed_dim = 4, 32, 16
    key = jax.random.PRNGKey(0)
    kx, kp = jax.random.split(key)
    x = jax.random.normal(kx, (2, in_channel, 16, 16), dtype=jnp.float32)  # NCHW
    params = make_params(kp, in_channel, channel, embed_dim)

    fwd = jax.jit(encoder_forward)
    out = jax.block_until_ready(fwd(params, x))
    ref = jax.block_until_ready(encoder_ref(params, x))

    assert out.shape == (2, embed_dim, 2, 2), out.shape
    # bf16 MXU operands (per review) -> slightly looser tolerance than pure f32.
    assert jnp.allclose(out, ref, atol=2e-2, rtol=2e-2), "mismatch vs reference"
    print("KERNEL_OK")
</pallas_src>

<mosaic_0001>
module attributes {stable_mosaic.version = 11 : i64} {
  func.func @_encoder_kernel(%arg0: i32, %arg1: memref<1x16x128xbf16, #tpu.memory_space<vmem>>, %arg2: memref<4x8x16xbf16, #tpu.memory_space<vmem>>, %arg3: memref<512x256xbf16, #tpu.memory_space<vmem>>, %arg4: memref<1x256xf32, #tpu.memory_space<vmem>>, %arg5: memref<4x4x8xbf16, #tpu.memory_space<vmem>>, %arg6: memref<1024x128xbf16, #tpu.memory_space<vmem>>, %arg7: memref<1x128xf32, #tpu.memory_space<vmem>>, %arg8: memref<4x2x4xbf16, #tpu.memory_space<vmem>>, %arg9: memref<512x64xbf16, #tpu.memory_space<vmem>>, %arg10: memref<1x64xf32, #tpu.memory_space<vmem>>, %arg11: memref<64x32xbf16, #tpu.memory_space<vmem>>, %arg12: memref<1x32xf32, #tpu.memory_space<vmem>>, %arg13: memref<1x2x32xf32, #tpu.memory_space<vmem>>) attributes {dimension_semantics = [#tpu.dimension_semantics<parallel>], iteration_bounds = array<i64: 2>, scalar_prefetch = 0 : i64, scratch_operands = 0 : i64, tpu.core_type = #tpu.core_type<tc>, window_params = [{transform_indices = @transform_0, window_bounds = array<i64: 1, 16, 128>}, {pipeline_mode = #tpu.pipeline_mode<synchronous>, transform_indices = @transform_1, window_bounds = array<i64: 4, 8, 16>}, {pipeline_mode = #tpu.pipeline_mode<synchronous>, transform_indices = @transform_2, window_bounds = array<i64: 512, 256>}, {pipeline_mode = #tpu.pipeline_mode<synchronous>, transform_indices = @transform_3, window_bounds = array<i64: 1, 256>}, {pipeline_mode = #tpu.pipeline_mode<synchronous>, transform_indices = @transform_4, window_bounds = array<i64: 4, 4, 8>}, {pipeline_mode = #tpu.pipeline_mode<synchronous>, transform_indices = @transform_5, window_bounds = array<i64: 1024, 128>}, {pipeline_mode = #tpu.pipeline_mode<synchronous>, transform_indices = @transform_6, window_bounds = array<i64: 1, 128>}, {pipeline_mode = #tpu.pipeline_mode<synchronous>, transform_indices = @transform_7, window_bounds = array<i64: 4, 2, 4>}, {pipeline_mode = #tpu.pipeline_mode<synchronous>, transform_indices = @transform_8, window_bounds = array<i64: 512, 64>}, {pipeline_mode = #tpu.pipeline_mode<synchronous>, transform_indices = @transform_9, window_bounds = array<i64: 1, 64>}, {pipeline_mode = #tpu.pipeline_mode<synchronous>, transform_indices = @transform_10, window_bounds = array<i64: 64, 32>}, {pipeline_mode = #tpu.pipeline_mode<synchronous>, transform_indices = @transform_11, window_bounds = array<i64: 1, 32>}, {transform_indices = @transform_12, window_bounds = array<i64: 1, 2, 32>}]} {
    %c0 = arith.constant 0 : index
    %c0_0 = arith.constant 0 : index
    %c0_1 = arith.constant 0 : index
    %0 = vector.load %arg1[%c0, %c0_0, %c0_1] : memref<1x16x128xbf16, #tpu.memory_space<vmem>>, vector<1x16x128xbf16>
    %1 = vector.shape_cast %0 : vector<1x16x128xbf16> to vector<16x128xbf16>
    %c0_2 = arith.constant 0 : index
    %c0_3 = arith.constant 0 : index
    %c0_4 = arith.constant 0 : index
    %2 = vector.load %arg2[%c0_2, %c0_3, %c0_4] : memref<4x8x16xbf16, #tpu.memory_space<vmem>>, vector<1x8x16xbf16>
    %3 = vector.shape_cast %2 : vector<1x8x16xbf16> to vector<8x16xbf16>
    %cst = arith.constant dense<0.000000e+00> : vector<8x128xf32>
    %4 = tpu.matmul %3, %1, %cst {dimension_numbers = #tpu.dot_dimension_numbers<[1], [0], [0], [1], [0, 0, 1, 1], [], []>} : vector<8x16xbf16>, vector<16x128xbf16>, vector<8x128xf32> -> vector<8x128xf32>
    %5 = arith.truncf %4 : vector<8x128xf32> to vector<8x128xbf16>
    %c1 = arith.constant 1 : index
    %c0_5 = arith.constant 0 : index
    %c0_6 = arith.constant 0 : index
    %6 = vector.load %arg2[%c1, %c0_5, %c0_6] : memref<4x8x16xbf16, #tpu.memory_space<vmem>>, vector<1x8x16xbf16>
    %7 = vector.shape_cast %6 : vector<1x8x16xbf16> to vector<8x16xbf16>
    %cst_7 = arith.constant dense<0.000000e+00> : vector<8x128xf32>
    %8 = tpu.matmul %7, %1, %cst_7 {dimension_numbers = #tpu.dot_dimension_numbers<[1], [0], [0], [1], [0, 0, 1, 1], [], []>} : vector<8x16xbf16>, vector<16x128xbf16>, vector<8x128xf32> -> vector<8x128xf32>
    %9 = arith.truncf %8 : vector<8x128xf32> to vector<8x128xbf16>
    %c2 = arith.constant 2 : index
    %c0_8 = arith.constant 0 : index
    %c0_9 = arith.constant 0 : index
    %10 = vector.load %arg2[%c2, %c0_8, %c0_9] : memref<4x8x16xbf16, #tpu.memory_space<vmem>>, vector<1x8x16xbf16>
    %11 = vector.shape_cast %10 : vector<1x8x16xbf16> to vector<8x16xbf16>
    %cst_10 = arith.constant dense<0.000000e+00> : vector<8x128xf32>
    %12 = tpu.matmul %11, %1, %cst_10 {dimension_numbers = #tpu.dot_dimension_numbers<[1], [0], [0], [1], [0, 0, 1, 1], [], []>} : vector<8x16xbf16>, vector<16x128xbf16>, vector<8x128xf32> -> vector<8x128xf32>
    %13 = arith.truncf %12 : vector<8x128xf32> to vector<8x128xbf16>
    %c3 = arith.constant 3 : index
    %c0_11 = arith.constant 0 : index
    %c0_12 = arith.constant 0 : index
    %14 = vector.load %arg2[%c3, %c0_11, %c0_12] : memref<4x8x16xbf16, #tpu.memory_space<vmem>>, vector<1x8x16xbf16>
    %15 = vector.shape_cast %14 : vector<1x8x16xbf16> to vector<8x16xbf16>
    %cst_13 = arith.constant dense<0.000000e+00> : vector<8x128xf32>
    %16 = tpu.matmul %15, %1, %cst_13 {dimension_numbers = #tpu.dot_dimension_numbers<[1], [0], [0], [1], [0, 0, 1, 1], [], []>} : vector<8x16xbf16>, vector<16x128xbf16>, vector<8x128xf32> -> vector<8x128xf32>
    %17 = arith.truncf %16 : vector<8x128xf32> to vector<8x128xbf16>
    %18 = tpu.concatenate %5, %9, %13, %17 in 1 : vector<8x128xbf16>, vector<8x128xbf16>, vector<8x128xbf16>, vector<8x128xbf16> -> vector<8x512xbf16>
    %c0_14 = arith.constant 0 : index
    %c0_15 = arith.constant 0 : index
    %19 = vector.load %arg3[%c0_14, %c0_15] : memref<512x256xbf16, #tpu.memory_space<vmem>>, vector<512x256xbf16>
    %cst_16 = arith.constant dense<0.000000e+00> : vector<8x256xf32>
    %20 = tpu.matmul %18, %19, %cst_16 {dimension_numbers = #tpu.dot_dimension_numbers<[1], [0], [0], [1], [0, 0, 1, 1], [], []>} : vector<8x512xbf16>, vector<512x256xbf16>, vector<8x256xf32> -> vector<8x256xf32>
    %c0_17 = arith.constant 0 : index
    %c0_18 = arith.constant 0 : index
    %21 = vector.load %arg4[%c0_17, %c0_18] : memref<1x256xf32, #tpu.memory_space<vmem>>, vector<1x256xf32>
    %22 = vector.broadcast %21 : vector<1x256xf32> to vector<8x256xf32>
    %23 = arith.addf %20, %22 : vector<8x256xf32>
    %cst_19 = arith.constant 0.000000e+00 : f32
    %24 = vector.broadcast %cst_19 : f32 to vector<8x256xf32>
    %25 = arith.maximumf %23, %24 : vector<8x256xf32>
    %26 = arith.truncf %25 : vector<8x256xf32> to vector<8x256xbf16>
    %c0_20 = arith.constant 0 : index
    %c0_21 = arith.constant 0 : index
    %c0_22 = arith.constant 0 : index
    %27 = vector.load %arg5[%c0_20, %c0_21, %c0_22] : memref<4x4x8xbf16, #tpu.memory_space<vmem>>, vector<1x4x8xbf16>
    %28 = vector.shape_cast %27 : vector<1x4x8xbf16> to vector<4x8xbf16>
    %cst_23 = arith.constant dense<0.000000e+00> : vector<4x256xf32>
    %29 = tpu.matmul %28, %26, %cst_23 {dimension_numbers = #tpu.dot_dimension_numbers<[1], [0], [0], [1], [0, 0, 1, 1], [], []>} : vector<4x8xbf16>, vector<8x256xbf16>, vector<4x256xf32> -> vector<4x256xf32>
    %30 = arith.truncf %29 : vector<4x256xf32> to vector<4x256xbf16>
    %c1_24 = arith.constant 1 : index
    %c0_25 = arith.constant 0 : index
    %c0_26 = arith.constant 0 : index
    %31 = vector.load %arg5[%c1_24, %c0_25, %c0_26] : memref<4x4x8xbf16, #tpu.memory_space<vmem>>, vector<1x4x8xbf16>
    %32 = vector.shape_cast %31 : vector<1x4x8xbf16> to vector<4x8xbf16>
    %cst_27 = arith.constant dense<0.000000e+00> : vector<4x256xf32>
    %33 = tpu.matmul %32, %26, %cst_27 {dimension_numbers = #tpu.dot_dimension_numbers<[1], [0], [0], [1], [0, 0, 1, 1], [], []>} : vector<4x8xbf16>, vector<8x256xbf16>, vector<4x256xf32> -> vector<4x256xf32>
    %34 = arith.truncf %33 : vector<4x256xf32> to vector<4x256xbf16>
    %c2_28 = arith.constant 2 : index
    %c0_29 = arith.constant 0 : index
    %c0_30 = arith.constant 0 : index
    %35 = vector.load %arg5[%c2_28, %c0_29, %c0_30] : memref<4x4x8xbf16, #tpu.memory_space<vmem>>, vector<1x4x8xbf16>
    %36 = vector.shape_cast %35 : vector<1x4x8xbf16> to vector<4x8xbf16>
    %cst_31 = arith.constant dense<0.000000e+00> : vector<4x256xf32>
    %37 = tpu.matmul %36, %26, %cst_31 {dimension_numbers = #tpu.dot_dimension_numbers<[1], [0], [0], [1], [0, 0, 1, 1], [], []>} : vector<4x8xbf16>, vector<8x256xbf16>, vector<4x256xf32> -> vector<4x256xf32>
    %38 = arith.truncf %37 : vector<4x256xf32> to vector<4x256xbf16>
    %c3_32 = arith.constant 3 : index
    %c0_33 = arith.constant 0 : index
    %c0_34 = arith.constant 0 : index
    %39 = vector.load %arg5[%c3_32, %c0_33, %c0_34] : memref<4x4x8xbf16, #tpu.memory_space<vmem>>, vector<1x4x8xbf16>
    %40 = vector.shape_cast %39 : vector<1x4x8xbf16> to vector<4x8xbf16>
    %cst_35 = arith.constant dense<0.000000e+00> : vector<4x256xf32>
    %41 = tpu.matmul %40, %26, %cst_35 {dimension_numbers = #tpu.dot_dimension_numbers<[1], [0], [0], [1], [0, 0, 1, 1], [], []>} : vector<4x8xbf16>, vector<8x256xbf16>, vector<4x256xf32> -> vector<4x256xf32>
    %42 = arith.truncf %41 : vector<4x256xf32> to vector<4x256xbf16>
    %43 = tpu.concatenate %30, %34, %38, %42 in 1 : vector<4x256xbf16>, vector<4x256xbf16>, vector<4x256xbf16>, vector<4x256xbf16> -> vector<4x1024xbf16>
    %c0_36 = arith.constant 0 : index
    %c0_37 = arith.constant 0 : index
    %44 = vector.load %arg6[%c0_36, %c0_37] : memref<1024x128xbf16, #tpu.memory_space<vmem>>, vector<1024x128xbf16>
    %cst_38 = arith.constant dense<0.000000e+00> : vector<4x128xf32>
    %45 = tpu.matmul %43, %44, %cst_38 {dimension_numbers = #tpu.dot_dimension_numbers<[1], [0], [0], [1], [0, 0, 1, 1], [], []>} : vector<4x1024xbf16>, vector<1024x128xbf16>, vector<4x128xf32> -> vector<4x128xf32>
    %c0_39 = arith.constant 0 : index
    %c0_40 = arith.constant 0 : index
    %46 = vector.load %arg7[%c0_39, %c0_40] : memref<1x128xf32, #tpu.memory_space<vmem>>, vector<1x128xf32>
    %47 = vector.broadcast %46 : vector<1x128xf32> to vector<4x128xf32>
    %48 = arith.addf %45, %47 : vector<4x128xf32>
    %cst_41 = arith.constant 0.000000e+00 : f32
    %49 = vector.broadcast %cst_41 : f32 to vector<4x128xf32>
    %50 = arith.maximumf %48, %49 : vector<4x128xf32>
    %51 = arith.truncf %50 : vector<4x128xf32> to vector<4x128xbf16>
    %c0_42 = arith.constant 0 : index
    %c0_43 = arith.constant 0 : index
    %c0_44 = arith.constant 0 : index
    %52 = vector.load %arg8[%c0_42, %c0_43, %c0_44] : memref<4x2x4xbf16, #tpu.memory_space<vmem>>, vector<1x2x4xbf16>
    %53 = vector.shape_cast %52 : vector<1x2x4xbf16> to vector<2x4xbf16>
    %cst_45 = arith.constant dense<0.000000e+00> : vector<2x128xf32>
    %54 = tpu.matmul %53, %51, %cst_45 {dimension_numbers = #tpu.dot_dimension_numbers<[1], [0], [0], [1], [0, 0, 1, 1], [], []>} : vector<2x4xbf16>, vector<4x128xbf16>, vector<2x128xf32> -> vector<2x128xf32>
    %55 = arith.truncf %54 : vector<2x128xf32> to vector<2x128xbf16>
    %c1_46 = arith.constant 1 : index
    %c0_47 = arith.constant 0 : index
    %c0_48 = arith.constant 0 : index
    %56 = vector.load %arg8[%c1_46, %c0_47, %c0_48] : memref<4x2x4xbf16, #tpu.memory_space<vmem>>, vector<1x2x4xbf16>
    %57 = vector.shape_cast %56 : vector<1x2x4xbf16> to vector<2x4xbf16>
    %cst_49 = arith.constant dense<0.000000e+00> : vector<2x128xf32>
    %58 = tpu.matmul %57, %51, %cst_49 {dimension_numbers = #tpu.dot_dimension_numbers<[1], [0], [0], [1], [0, 0, 1, 1], [], []>} : vector<2x4xbf16>, vector<4x128xbf16>, vector<2x128xf32> -> vector<2x128xf32>
    %59 = arith.truncf %58 : vector<2x128xf32> to vector<2x128xbf16>
    %c2_50 = arith.constant 2 : index
    %c0_51 = arith.constant 0 : index
    %c0_52 = arith.constant 0 : index
    %60 = vector.load %arg8[%c2_50, %c0_51, %c0_52] : memref<4x2x4xbf16, #tpu.memory_space<vmem>>, vector<1x2x4xbf16>
    %61 = vector.shape_cast %60 : vector<1x2x4xbf16> to vector<2x4xbf16>
    %cst_53 = arith.constant dense<0.000000e+00> : vector<2x128xf32>
    %62 = tpu.matmul %61, %51, %cst_53 {dimension_numbers = #tpu.dot_dimension_numbers<[1], [0], [0], [1], [0, 0, 1, 1], [], []>} : vector<2x4xbf16>, vector<4x128xbf16>, vector<2x128xf32> -> vector<2x128xf32>
    %63 = arith.truncf %62 : vector<2x128xf32> to vector<2x128xbf16>
    %c3_54 = arith.constant 3 : index
    %c0_55 = arith.constant 0 : index
    %c0_56 = arith.constant 0 : index
    %64 = vector.load %arg8[%c3_54, %c0_55, %c0_56] : memref<4x2x4xbf16, #tpu.memory_space<vmem>>, vector<1x2x4xbf16>
    %65 = vector.shape_cast %64 : vector<1x2x4xbf16> to vector<2x4xbf16>
    %cst_57 = arith.constant dense<0.000000e+00> : vector<2x128xf32>
    %66 = tpu.matmul %65, %51, %cst_57 {dimension_numbers = #tpu.dot_dimension_numbers<[1], [0], [0], [1], [0, 0, 1, 1], [], []>} : vector<2x4xbf16>, vector<4x128xbf16>, vector<2x128xf32> -> vector<2x128xf32>
    %67 = arith.truncf %66 : vector<2x128xf32> to vector<2x128xbf16>
    %68 = tpu.concatenate %55, %59, %63, %67 in 1 : vector<2x128xbf16>, vector<2x128xbf16>, vector<2x128xbf16>, vector<2x128xbf16> -> vector<2x512xbf16>
    %c0_58 = arith.constant 0 : index
    %c0_59 = arith.constant 0 : index
    %69 = vector.load %arg9[%c0_58, %c0_59] : memref<512x64xbf16, #tpu.memory_space<vmem>>, vector<512x64xbf16>
    %cst_60 = arith.constant dense<0.000000e+00> : vector<2x64xf32>
    %70 = tpu.matmul %68, %69, %cst_60 {dimension_numbers = #tpu.dot_dimension_numbers<[1], [0], [0], [1], [0, 0, 1, 1], [], []>} : vector<2x512xbf16>, vector<512x64xbf16>, vector<2x64xf32> -> vector<2x64xf32>
    %c0_61 = arith.constant 0 : index
    %c0_62 = arith.constant 0 : index
    %71 = vector.load %arg10[%c0_61, %c0_62] : memref<1x64xf32, #tpu.memory_space<vmem>>, vector<1x64xf32>
    %72 = vector.broadcast %71 : vector<1x64xf32> to vector<2x64xf32>
    %73 = arith.addf %70, %72 : vector<2x64xf32>
    %cst_63 = arith.constant 0.000000e+00 : f32
    %74 = vector.broadcast %cst_63 : f32 to vector<2x64xf32>
    %75 = arith.maximumf %73, %74 : vector<2x64xf32>
    %76 = arith.truncf %75 : vector<2x64xf32> to vector<2x64xbf16>
    %c0_64 = arith.constant 0 : index
    %c0_65 = arith.constant 0 : index
    %77 = vector.load %arg11[%c0_64, %c0_65] : memref<64x32xbf16, #tpu.memory_space<vmem>>, vector<64x32xbf16>
    %cst_66 = arith.constant dense<0.000000e+00> : vector<2x32xf32>
    %78 = tpu.matmul %76, %77, %cst_66 {dimension_numbers = #tpu.dot_dimension_numbers<[1], [0], [0], [1], [0, 0, 1, 1], [], []>} : vector<2x64xbf16>, vector<64x32xbf16>, vector<2x32xf32> -> vector<2x32xf32>
    %c0_67 = arith.constant 0 : index
    %c0_68 = arith.constant 0 : index
    %79 = vector.load %arg12[%c0_67, %c0_68] : memref<1x32xf32, #tpu.memory_space<vmem>>, vector<1x32xf32>
    %80 = vector.broadcast %79 : vector<1x32xf32> to vector<2x32xf32>
    %81 = arith.addf %78, %80 : vector<2x32xf32>
    %c0_69 = arith.constant 0 : index
    %c0_70 = arith.constant 0 : index
    %c0_71 = arith.constant 0 : index
    %82 = vector.load %arg13[%c0_69, %c0_70, %c0_71] : memref<1x2x32xf32, #tpu.memory_space<vmem>>, vector<1x2x32xf32>
    %83 = vector.shape_cast %82 : vector<1x2x32xf32> to vector<2x32xf32>
    %84 = vector.shape_cast %81 : vector<2x32xf32> to vector<1x2x32xf32>
    tpu.vector_store %arg13[%c0_69, %c0_70, %c0_71], %84 {strides = array<i32>} : memref<1x2x32xf32, #tpu.memory_space<vmem>>, vector<1x2x32xf32>,
    return
  }
  func.func @transform_0(%arg0: i32) -> (i32, i32, i32) {
    %c0_i32 = arith.constant 0 : i32
    %c0_i32_0 = arith.constant 0 : i32
    %c0_i32_1 = arith.constant 0 : i32
    return %arg0, %c0_i32, %c0_i32_0 : i32, i32, i32
  }
  func.func @transform_1(%arg0: i32) -> (i32, i32, i32) {
    %c0_i32 = arith.constant 0 : i32
    %c0_i32_0 = arith.constant 0 : i32
    %c0_i32_1 = arith.constant 0 : i32
    %c0_i32_2 = arith.constant 0 : i32
    return %c0_i32, %c0_i32_0, %c0_i32_1 : i32, i32, i32
  }
  func.func @transform_2(%arg0: i32) -> (i32, i32) {
    %c0_i32 = arith.constant 0 : i32
    %c0_i32_0 = arith.constant 0 : i32
    %c0_i32_1 = arith.constant 0 : i32
    return %c0_i32, %c0_i32_0 : i32, i32
  }
  func.func @transform_3(%arg0: i32) -> (i32, i32) {
    %c0_i32 = arith.constant 0 : i32
    %c0_i32_0 = arith.constant 0 : i32
    %c0_i32_1 = arith.constant 0 : i32
    return %c0_i32, %c0_i32_0 : i32, i32
  }
  func.func @transform_4(%arg0: i32) -> (i32, i32, i32) {
    %c0_i32 = arith.constant 0 : i32
    %c0_i32_0 = arith.constant 0 : i32
    %c0_i32_1 = arith.constant 0 : i32
    %c0_i32_2 = arith.constant 0 : i32
    return %c0_i32, %c0_i32_0, %c0_i32_1 : i32, i32, i32
  }
  func.func @transform_5(%arg0: i32) -> (i32, i32) {
    %c0_i32 = arith.constant 0 : i32
    %c0_i32_0 = arith.constant 0 : i32
    %c0_i32_1 = arith.constant 0 : i32
    return %c0_i32, %c0_i32_0 : i32, i32
  }
  func.func @transform_6(%arg0: i32) -> (i32, i32) {
    %c0_i32 = arith.constant 0 : i32
    %c0_i32_0 = arith.constant 0 : i32
    %c0_i32_1 = arith.constant 0 : i32
    return %c0_i32, %c0_i32_0 : i32, i32
  }
  func.func @transform_7(%arg0: i32) -> (i32, i32, i32) {
    %c0_i32 = arith.constant 0 : i32
    %c0_i32_0 = arith.constant 0 : i32
    %c0_i32_1 = arith.constant 0 : i32
    %c0_i32_2 = arith.constant 0 : i32
    return %c0_i32, %c0_i32_0, %c0_i32_1 : i32, i32, i32
  }
  func.func @transform_8(%arg0: i32) -> (i32, i32) {
    %c0_i32 = arith.constant 0 : i32
    %c0_i32_0 = arith.constant 0 : i32
    %c0_i32_1 = arith.constant 0 : i32
    return %c0_i32, %c0_i32_0 : i32, i32
  }
  func.func @transform_9(%arg0: i32) -> (i32, i32) {
    %c0_i32 = arith.constant 0 : i32
    %c0_i32_0 = arith.constant 0 : i32
    %c0_i32_1 = arith.constant 0 : i32
    return %c0_i32, %c0_i32_0 : i32, i32
  }
  func.func @transform_10(%arg0: i32) -> (i32, i32) {
    %c0_i32 = arith.constant 0 : i32
    %c0_i32_0 = arith.constant 0 : i32
    %c0_i32_1 = arith.constant 0 : i32
    return %c0_i32, %c0_i32_0 : i32, i32
  }
  func.func @transform_11(%arg0: i32) -> (i32, i32) {
    %c0_i32 = arith.constant 0 : i32
    %c0_i32_0 = arith.constant 0 : i32
    %c0_i32_1 = arith.constant 0 : i32
    return %c0_i32, %c0_i32_0 : i32, i32
  }
  func.func @transform_12(%arg0: i32) -> (i32, i32, i32) {
    %c0_i32 = arith.constant 0 : i32
    %c0_i32_0 = arith.constant 0 : i32
    %c0_i32_1 = arith.constant 0 : i32
    return %arg0, %c0_i32, %c0_i32_0 : i32, i32, i32
  }
}

</mosaic_0001>

<llo_original>
// kernel: encoder_forward.1
$region0: #{encoder_forward.1}
  #allocation0 [shape = 'u32[]', space=smem, size = 0x4, offset = 0x4, fixed_abs, tag = 'smem constant byte address 0x4 - core index']
  #allocation1 [shape = 'u32[144,128]{1,0:T(1,128)}', space=vmem, size = 0x12000, scoped, tag = 'internal scratch']
  %s0 = inlined_call_operand.vmem [shape: bf16[2,16,128], index: 0, kind: input, shape index: {}]
  %s1 = inlined_call_operand.vmem [shape: bf16[4,8,16], index: 1, kind: input, shape index: {}]
  %s2 = inlined_call_operand.vmem [shape: bf16[512,256], index: 2, kind: input, shape index: {}]
  %s3 = inlined_call_operand.vmem [shape: f32[1,256], index: 3, kind: input, shape index: {}]
  %s4 = inlined_call_operand.vmem [shape: bf16[4,4,8], index: 4, kind: input, shape index: {}]
  %s5 = inlined_call_operand.vmem [shape: bf16[1024,128], index: 5, kind: input, shape index: {}]
  %s6 = inlined_call_operand.vmem [shape: f32[1,128], index: 6, kind: input, shape index: {}]
  %s7 = inlined_call_operand.vmem [shape: bf16[4,2,4], index: 7, kind: input, shape index: {}]
  %s8 = inlined_call_operand.vmem [shape: bf16[512,64], index: 8, kind: input, shape index: {}]
  %s9 = inlined_call_operand.vmem [shape: f32[1,64], index: 9, kind: input, shape index: {}]
  %s10 = inlined_call_operand.vmem [shape: bf16[64,32], index: 10, kind: input, shape index: {}]
  %s11 = inlined_call_operand.vmem [shape: f32[1,32], index: 11, kind: input, shape index: {}]
  %s12 = inlined_call_operand.vmem [shape: f32[2,2,32], index: 12, kind: output, shape index: {}]
  %s13 = sld [smem:[#allocation0]]
  $region81: #{encoder_forward.1} parent=0
    _
  %s15 = ssub.s32 1, %s13
  %s16 = scalar_select 0, %s15, %s13
  loop: start=0, step=1, limit=4
  $region2: #{encoder_forward.1} parent=0 // loop_pre_header
    _
  $region3: #{encoder_forward.1} parent=0 // loop_header
    %s18 = sphi 0, %s22
    %p19 = scmp.ge.s32.totalorder %s18, 4
    %s28 = sphi 0, %s30
    %s31 = sphi 0, %s28
    %s32 = sphi 0, %s31
    %s48 = sphi 0, %s32
    %s52 = sphi 0, %s52
    %s54 = sphi 0, %s52
    %s55 = sphi 0, %s54
    %s69 = sphi 0, %s55
    %s73 = sphi 0, %s73
    %s75 = sphi 0, %s73
    %s76 = sphi 0, %s75
    %s90 = sphi 0, %s76
    %s94 = sphi 0, %s94
    %s96 = sphi 0, %s94
    %s97 = sphi 0, %s96
    %s111 = sphi 0, %s97
    %s115 = sphi 0, %s115
    %s117 = sphi 0, %s115
    %s118 = sphi 0, %s117
    %s132 = sphi 0, %s118
    %s136 = sphi 0, %s136
    %s138 = sphi 0, %s136
    %s139 = sphi 0, %s138
    %s153 = sphi 0, %s139
    %s157 = sphi 0, %s157
    %s159 = sphi 0, %s157
    %s160 = sphi 0, %s159
    %s174 = sphi 0, %s160
    %s178 = sphi 0, %s178
    %s180 = sphi 0, %s178
    %s181 = sphi 0, %s180
    %s195 = sphi 0, %s181
    %s199 = sphi 0, %s199
    %s201 = sphi 0, %s199
    %s202 = sphi 0, %s201
    %s216 = sphi 0, %s202
    %s220 = sphi 0, %s220
    %s222 = sphi 0, %s220
    %s223 = sphi 0, %s222
    %s237 = sphi 0, %s223
    %s241 = sphi 0, %s241
    %s243 = sphi 0, %s241
    %s244 = sphi 0, %s243
    %s258 = sphi 0, %s244
    %s262 = sphi 0, %s262
    %s264 = sphi 0, %s262
    %s265 = sphi 0, %s264
    %s279 = sphi 0, %s265
    %s285 = sphi 0, %s287
    %s288 = sphi 0, %s285
    %s289 = sphi 0, %s288
    %s305 = sphi 0, %s289
  $region4: #{encoder_forward.1} parent=0 // loop_header_branch
    %21 = sbr.rel (%p19) target = $region8
  $region5: #{encoder_forward.1} parent=0 // loop_body
    %s23 = ssub.s32 %s18, 1
    %s24 = ssub.s32 %s18, 2
    %s25 = sadd.s32 %s18, 1
    %s26 = ssub.s32 %s18, %s25
    %p27 = scmp.eq.s32.totalorder %s26, 0
    %s29 = sadd.s32 %s28, 1
    %s30 = scalar_select %p27, %s28, %s29
    %p33 = pneg %p27
    %p34 = scmp.eq.s32.totalorder %s18, 1
    %p35 = por %p33, %p34
    %p36 = scmp.ne.s32.totalorder %s28, %s31
    %p37 = scmp.eq.s32.totalorder %s18, 0
    %p38 = por %p36, %p37
    %p39 = scmp.ne.s32.totalorder %s28, %s31
    %p40 = scmp.eq.s32.totalorder %s23, 1
    %p41 = por %p39, %p40
    %p42 = scmp.ne.s32.totalorder %s31, %s32
    %p43 = scmp.eq.s32.totalorder %s23, 0
    %p44 = por %p42, %p43
    %p45 = scmp.ne.s32.totalorder %s31, %s32
    %p46 = scmp.eq.s32.totalorder %s24, 1
    %p47 = por %p45, %p46
    %p49 = scmp.ne.s32.totalorder %s32, %s48
    %p50 = scmp.eq.s32.totalorder %s24, 0
    %p51 = por %p49, %p50
    %s53 = sadd.s32 %s52, 1
    %p56 = scmp.eq.s32.totalorder %s18, 1
    %p57 = scmp.ne.s32.totalorder %s52, %s54
    %p58 = scmp.eq.s32.totalorder %s18, 0
    %p59 = por %p57, %p58
    %p60 = scmp.ne.s32.totalorder %s52, %s54
    %p61 = scmp.eq.s32.totalorder %s23, 1
    %p62 = por %p60, %p61
    %p63 = scmp.ne.s32.totalorder %s54, %s55
    %p64 = scmp.eq.s32.totalorder %s23, 0
    %p65 = por %p63, %p64
    %p66 = scmp.ne.s32.totalorder %s54, %s55
    %p67 = scmp.eq.s32.totalorder %s24, 1
    %p68 = por %p66, %p67
    %p70 = scmp.ne.s32.totalorder %s55, %s69
    %p71 = scmp.eq.s32.totalorder %s24, 0
    %p72 = por %p70, %p71
    %s74 = sadd.s32 %s73, 1
    %p77 = scmp.eq.s32.totalorder %s18, 1
    %p78 = scmp.ne.s32.totalorder %s73, %s75
    %p79 = scmp.eq.s32.totalorder %s18, 0
    %p80 = por %p78, %p79
    %p81 = scmp.ne.s32.totalorder %s73, %s75
    %p82 = scmp.eq.s32.totalorder %s23, 1
    %p83 = por %p81, %p82
    %p84 = scmp.ne.s32.totalorder %s75, %s76
    %p85 = scmp.eq.s32.totalorder %s23, 0
    %p86 = por %p84, %p85
    %p87 = scmp.ne.s32.totalorder %s75, %s76
    %p88 = scmp.eq.s32.totalorder %s24, 1
    %p89 = por %p87, %p88
    %p91 = scmp.ne.s32.totalorder %s76, %s90
    %p92 = scmp.eq.s32.totalorder %s24, 0
    %p93 = por %p91, %p92
    %s95 = sadd.s32 %s94, 1
    %p98 = scmp.eq.s32.totalorder %s18, 1
    %p99 = scmp.ne.s32.totalorder %s94, %s96
    %p100 = scmp.eq.s32.totalorder %s18, 0
    %p101 = por %p99, %p100
    %p102 = scmp.ne.s32.totalorder %s94, %s96
    %p103 = scmp.eq.s32.totalorder %s23, 1
    %p104 = por %p102, %p103
    %p105 = scmp.ne.s32.totalorder %s96, %s97
    %p106 = scmp.eq.s32.totalorder %s23, 0
    %p107 = por %p105, %p106
    %p108 = scmp.ne.s32.totalorder %s96, %s97
    %p109 = scmp.eq.s32.totalorder %s24, 1
    %p110 = por %p108, %p109
    %p112 = scmp.ne.s32.totalorder %s97, %s111
    %p113 = scmp.eq.s32.totalorder %s24, 0
    %p114 = por %p112, %p113
    %s116 = sadd.s32 %s115, 1
    %p119 = scmp.eq.s32.totalorder %s18, 1
    %p120 = scmp.ne.s32.totalorder %s115, %s117
    %p121 = scmp.eq.s32.totalorder %s18, 0
    %p122 = por %p120, %p121
    %p123 = scmp.ne.s32.totalorder %s115, %s117
    %p124 = scmp.eq.s32.totalorder %s23, 1
    %p125 = por %p123, %p124
    %p126 = scmp.ne.s32.totalorder %s117, %s118
    %p127 = scmp.eq.s32.totalorder %s23, 0
    %p128 = por %p126, %p127
    %p129 = scmp.ne.s32.totalorder %s117, %s118
    %p130 = scmp.eq.s32.totalorder %s24, 1
    %p131 = por %p129, %p130
    %p133 = scmp.ne.s32.totalorder %s118, %s132
    %p134 = scmp.eq.s32.totalorder %s24, 0
    %p135 = por %p133, %p134
    %s137 = sadd.s32 %s136, 1
    %p140 = scmp.eq.s32.totalorder %s18, 1
    %p141 = scmp.ne.s32.totalorder %s136, %s138
    %p142 = scmp.eq.s32.totalorder %s18, 0
    %p143 = por %p141, %p142
    %p144 = scmp.ne.s32.totalorder %s136, %s138
    %p145 = scmp.eq.s32.totalorder %s23, 1
    %p146 = por %p144, %p145
    %p147 = scmp.ne.s32.totalorder %s138, %s139
    %p148 = scmp.eq.s32.totalorder %s23, 0
    %p149 = por %p147, %p148
    %p150 = scmp.ne.s32.totalorder %s138, %s139
    %p151 = scmp.eq.s32.totalorder %s24, 1
    %p152 = por %p150, %p151
    %p154 = scmp.ne.s32.totalorder %s139, %s153
    %p155 = scmp.eq.s32.totalorder %s24, 0
    %p156 = por %p154, %p155
    %s158 = sadd.s32 %s157, 1
    %p161 = scmp.eq.s32.totalorder %s18, 1
    %p162 = scmp.ne.s32.totalorder %s157, %s159
    %p163 = scmp.eq.s32.totalorder %s18, 0
    %p164 = por %p162, %p163
    %p165 = scmp.ne.s32.totalorder %s157, %s159
    %p166 = scmp.eq.s32.totalorder %s23, 1
    %p167 = por %p165, %p166
    %p168 = scmp.ne.s32.totalorder %s159, %s160
    %p169 = scmp.eq.s32.totalorder %s23, 0
    %p170 = por %p168, %p169
    %p171 = scmp.ne.s32.totalorder %s159, %s160
    %p172 = scmp.eq.s32.totalorder %s24, 1
    %p173 = por %p171, %p172
    %p175 = scmp.ne.s32.totalorder %s160, %s174
    %p176 = scmp.eq.s32.totalorder %s24, 0
    %p177 = por %p175, %p176
    %s179 = sadd.s32 %s178, 1
    %p182 = scmp.eq.s32.totalorder %s18, 1
    %p183 = scmp.ne.s32.totalorder %s178, %s180
    %p184 = scmp.eq.s32.totalorder %s18, 0
    %p185 = por %p183, %p184
    %p186 = scmp.ne.s32.totalorder %s178, %s180
    %p187 = scmp.eq.s32.totalorder %s23, 1
    %p188 = por %p186, %p187
    %p189 = scmp.ne.s32.totalorder %s180, %s181
    %p190 = scmp.eq.s32.totalorder %s23, 0
    %p191 = por %p189, %p190
    %p192 = scmp.ne.s32.totalorder %s180, %s181
    %p193 = scmp.eq.s32.totalorder %s24, 1
    %p194 = por %p192, %p193
    %p196 = scmp.ne.s32.totalorder %s181, %s195
    %p197 = scmp.eq.s32.totalorder %s24, 0
    %p198 = por %p196, %p197
    %s200 = sadd.s32 %s199, 1
    %p203 = scmp.eq.s32.totalorder %s18, 1
    %p204 = scmp.ne.s32.totalorder %s199, %s201
    %p205 = scmp.eq.s32.totalorder %s18, 0
    %p206 = por %p204, %p205
    %p207 = scmp.ne.s32.totalorder %s199, %s201
    %p208 = scmp.eq.s32.totalorder %s23, 1
    %p209 = por %p207, %p208
    %p210 = scmp.ne.s32.totalorder %s201, %s202
    %p211 = scmp.eq.s32.totalorder %s23, 0
    %p212 = por %p210, %p211
    %p213 = scmp.ne.s32.totalorder %s201, %s202
    %p214 = scmp.eq.s32.totalorder %s24, 1
    %p215 = por %p213, %p214
    %p217 = scmp.ne.s32.totalorder %s202, %s216
    %p218 = scmp.eq.s32.totalorder %s24, 0
    %p219 = por %p217, %p218
    %s221 = sadd.s32 %s220, 1
    %p224 = scmp.eq.s32.totalorder %s18, 1
    %p225 = scmp.ne.s32.totalorder %s220, %s222
    %p226 = scmp.eq.s32.totalorder %s18, 0
    %p227 = por %p225, %p226
    %p228 = scmp.ne.s32.totalorder %s220, %s222
    %p229 = scmp.eq.s32.totalorder %s23, 1
    %p230 = por %p228, %p229
    %p231 = scmp.ne.s32.totalorder %s222, %s223
    %p232 = scmp.eq.s32.totalorder %s23, 0
    %p233 = por %p231, %p232
    %p234 = scmp.ne.s32.totalorder %s222, %s223
    %p235 = scmp.eq.s32.totalorder %s24, 1
    %p236 = por %p234, %p235
    %p238 = scmp.ne.s32.totalorder %s223, %s237
    %p239 = scmp.eq.s32.totalorder %s24, 0
    %p240 = por %p238, %p239
    %s242 = sadd.s32 %s241, 1
    %p245 = scmp.eq.s32.totalorder %s18, 1
    %p246 = scmp.ne.s32.totalorder %s241, %s243
    %p247 = scmp.eq.s32.totalorder %s18, 0
    %p248 = por %p246, %p247
    %p249 = scmp.ne.s32.totalorder %s241, %s243
    %p250 = scmp.eq.s32.totalorder %s23, 1
    %p251 = por %p249, %p250
    %p252 = scmp.ne.s32.totalorder %s243, %s244
    %p253 = scmp.eq.s32.totalorder %s23, 0
    %p254 = por %p252, %p253
    %p255 = scmp.ne.s32.totalorder %s243, %s244
    %p256 = scmp.eq.s32.totalorder %s24, 1
    %p257 = por %p255, %p256
    %p259 = scmp.ne.s32.totalorder %s244, %s258
    %p260 = scmp.eq.s32.totalorder %s24, 0
    %p261 = por %p259, %p260
    %s263 = sadd.s32 %s262, 1
    %p266 = scmp.eq.s32.totalorder %s18, 1
    %p267 = scmp.ne.s32.totalorder %s262, %s264
    %p268 = scmp.eq.s32.totalorder %s18, 0
    %p269 = por %p267, %p268
    %p270 = scmp.ne.s32.totalorder %s262, %s264
    %p271 = scmp.eq.s32.totalorder %s23, 1
    %p272 = por %p270, %p271
    %p273 = scmp.ne.s32.totalorder %s264, %s265
    %p274 = scmp.eq.s32.totalorder %s23, 0
    %p275 = por %p273, %p274
    %p276 = scmp.ne.s32.totalorder %s264, %s265
    %p277 = scmp.eq.s32.totalorder %s24, 1
    %p278 = por %p276, %p277
    %p280 = scmp.ne.s32.totalorder %s265, %s279
    %p281 = scmp.eq.s32.totalorder %s24, 0
    %p282 = por %p280, %p281
    %s283 = ssub.s32 %s18, %s25
    %p284 = scmp.eq.s32.totalorder %s283, 0
    %s286 = sadd.s32 %s285, 1
    %s287 = scalar_select %p284, %s285, %s286
    %p290 = pneg %p284
    %p291 = scmp.eq.s32.totalorder %s18, 1
    %p292 = por %p290, %p291
    %p293 = scmp.ne.s32.totalorder %s285, %s288
    %p294 = scmp.eq.s32.totalorder %s18, 0
    %p295 = por %p293, %p294
    %p296 = scmp.ne.s32.totalorder %s285, %s288
    %p297 = scmp.eq.s32.totalorder %s23, 1
    %p298 = por %p296, %p297
    %p299 = scmp.ne.s32.totalorder %s288, %s289
    %p300 = scmp.eq.s32.totalorder %s23, 0
    %p301 = por %p299, %p300
    %p302 = scmp.ne.s32.totalorder %s288, %s289
    %p303 = scmp.eq.s32.totalorder %s24, 1
    %p304 = por %p302, %p303
    %p306 = scmp.ne.s32.totalorder %s289, %s305
    %p307 = scmp.eq.s32.totalorder %s24, 0
    %p308 = por %p306, %p307
    %p309 = scmp.le.s32.totalorder 1, %s18
    %p310 = scmp.lt.s32.totalorder %s18, 3
    %p311 = pnand %p309, %p310
    %p312 = pneg %p311
    // Predicated region
    $region9: #{encoder_forward.1} parent=5 // pred_check
      _
    $region10: #{encoder_forward.1} parent=5 // pred_check_branch
      %314 = sbr.rel (%p311) target = $region12
    $region11: #{encoder_forward.1} parent=5 // pred_region
      %s315 = ssub.s32 %s18, 1
      // Predicated region
      $region13: #{encoder_forward.1} parent=11 // pred_check
        %p316 = pneg %p65
      $region14: #{encoder_forward.1} parent=11 // pred_check_branch
        %318 = sbr.rel (%p316) target = $region16
      $region15: #{encoder_forward.1} parent=11 // pred_region
        _
      $region16: #{encoder_forward.1} parent=11 // pred_fallthru
        _
      // Predicated region
      $region17: #{encoder_forward.1} parent=11 // pred_check
        %p319 = pneg %p86
      $region18: #{encoder_forward.1} parent=11 // pred_check_branch
        %321 = sbr.rel (%p319) target = $region20
      $region19: #{encoder_forward.1} parent=11 // pred_region
        _
      $region20: #{encoder_forward.1} parent=11 // pred_fallthru
        _
      // Predicated region
      $region21: #{encoder_forward.1} parent=11 // pred_check
        %p322 = pneg %p107
      $region22: #{encoder_forward.1} parent=11 // pred_check_branch
        %324 = sbr.rel (%p322) target = $region24
      $region23: #{encoder_forward.1} parent=11 // pred_region
        _
      $region24: #{encoder_forward.1} parent=11 // pred_fallthru
        _
      // Predicated region
      $region25: #{encoder_forward.1} parent=11 // pred_check
        %p325 = pneg %p128
      $region26: #{encoder_forward.1} parent=11 // pred_check_branch
        %327 = sbr.rel (%p325) target = $region28
      $region27: #{encoder_forward.1} parent=11 // pred_region
        _
      $region28: #{encoder_forward.1} parent=11 // pred_fallthru
        _
      // Predicated region
      $region29: #{encoder_forward.1} parent=11 // pred_check
        %p328 = pneg %p149
      $region30: #{encoder_forward.1} parent=11 // pred_check_branch
        %330 = sbr.rel (%p328) target = $region32
      $region31: #{encoder_forward.1} parent=11 // pred_region
        _
      $region32: #{encoder_forward.1} parent=11 // pred_fallthru
        _
      // Predicated region
      $region33: #{encoder_forward.1} parent=11 // pred_check
        %p331 = pneg %p170
      $region34: #{encoder_forward.1} parent=11 // pred_check_branch
        %333 = sbr.rel (%p331) target = $region36
      $region35: #{encoder_forward.1} parent=11 // pred_region
        _
      $region36: #{encoder_forward.1} parent=11 // pred_fallthru
        _
      // Predicated region
      $region37: #{encoder_forward.1} parent=11 // pred_check
        %p334 = pneg %p191
      $region38: #{encoder_forward.1} parent=11 // pred_check_branch
        %336 = sbr.rel (%p334) target = $region40
      $region39: #{encoder_forward.1} parent=11 // pred_region
        _
      $region40: #{encoder_forward.1} parent=11 // pred_fallthru
        _
      // Predicated region
      $region41: #{encoder_forward.1} parent=11 // pred_check
        %p337 = pneg %p212
      $region42: #{encoder_forward.1} parent=11 // pred_check_branch
        %339 = sbr.rel (%p337) target = $region44
      $region43: #{encoder_forward.1} parent=11 // pred_region
        _
      $region44: #{encoder_forward.1} parent=11 // pred_fallthru
        _
      // Predicated region
      $region45: #{encoder_forward.1} parent=11 // pred_check
        %p340 = pneg %p233
      $region46: #{encoder_forward.1} parent=11 // pred_check_branch
        %342 = sbr.rel (%p340) target = $region48
      $region47: #{encoder_forward.1} parent=11 // pred_region
        _
      $region48: #{encoder_forward.1} parent=11 // pred_fallthru
        _
      // Predicated region
      $region49: #{encoder_forward.1} parent=11 // pred_check
        %p343 = pneg %p254
      $region50: #{encoder_forward.1} parent=11 // pred_check_branch
        %345 = sbr.rel (%p343) target = $region52
      $region51: #{encoder_forward.1} parent=11 // pred_region
        _
      $region52: #{encoder_forward.1} parent=11 // pred_fallthru
        _
      // Predicated region
      $region53: #{encoder_forward.1} parent=11 // pred_check
        %p346 = pneg %p275
      $region54: #{encoder_forward.1} parent=11 // pred_check_branch
        %348 = sbr.rel (%p346) target = $region56
      $region55: #{encoder_forward.1} parent=11 // pred_region
        _
      $region56: #{encoder_forward.1} parent=11 // pred_fallthru
        _
    $region12: #{encoder_forward.1} parent=5 // pred_fallthru
      _
    %p349 = scmp.lt.s32.totalorder %s18, 2
    // Predicated region
    $region57: #{encoder_forward.1} parent=5 // pred_check
      %p350 = pneg %p349
    $region58: #{encoder_forward.1} parent=5 // pred_check_branch
      %352 = sbr.rel (%p350) target = $region60
    $region59: #{encoder_forward.1} parent=5 // pred_region
      // Predicated region
      $region61: #{encoder_forward.1} parent=59 // pred_check
        %p353 = pneg %p38
      $region62: #{encoder_forward.1} parent=59 // pred_check_branch
        %355 = sbr.rel (%p353) target = $region64
      $region63: #{encoder_forward.1} parent=59 // pred_region
        %p356 = scmp.lt.s32.totalorder %s18, 1
        %s357 = scalar_select %p356, %s18, 1
        %s358 = smul.addr %s357, 2
        %s359 = smul.addr %s358, 4
        %s360 = scalar_lea.vmem %s0, %s359
      $region64: #{encoder_forward.1} parent=59 // pred_fallthru
        _
    $region60: #{encoder_forward.1} parent=5 // pred_fallthru
      _
    %p361 = scmp.le.s32.totalorder 1, %s18
    %p362 = scmp.lt.s32.totalorder %s18, 3
    %p363 = pnand %p361, %p362
    %p364 = pneg %p363
    // Predicated region
    $region65: #{encoder_forward.1} parent=5 // pred_check
      _
    $region66: #{encoder_forward.1} parent=5 // pred_check_branch
      %366 = sbr.rel (%p363) target = $region68
    $region67: #{encoder_forward.1} parent=5 // pred_region
      %s367 = ssub.s32 %s18, 1
      %p368 = scmp.lt.s32.totalorder %s23, 1
      %s369 = scalar_select %p368, %s23, 1
      %s370 = smul.addr %s369, 2
      %s371 = smul.addr %s370, 4
      %s372 = scalar_lea.vmem %s0, %s371
      %p373 = pneg %p44
      %p374 = pneg %p41
      %p375 = pneg %p65
      %p376 = pneg %p62
      %p377 = pneg %p86
      %p378 = pneg %p83
      %p379 = pneg %p107
      %p380 = pneg %p104
      %p381 = pneg %p128
      %p382 = pneg %p125
      %p383 = pneg %p149
      %p384 = pneg %p146
      %p385 = pneg %p170
      %p386 = pneg %p167
      %p387 = pneg %p191
      %p388 = pneg %p188
      %p389 = pneg %p212
      %p390 = pneg %p209
      %p391 = pneg %p233
      %p392 = pneg %p230
      %p393 = pneg %p254
      %p394 = pneg %p251
      %p395 = pneg %p275
      %p396 = pneg %p272
      %p397 = pneg %p301
      %p398 = pneg %p298
      %p399 = scmp.lt.s32.totalorder %s23, 1
      %s400 = scalar_select %p399, %s23, 1
      %s401 = smul.addr %s400, 2
      %s402 = scalar_lea.vmem %s12, %s401
      %p403 = scmp.lt.s32.totalorder %s23, 1
      %s404 = scalar_select %p403, %s23, 1
      %s405 = smul.addr %s404, 2
      %s406 = smul.addr %s405, 4
      %s407 = scalar_lea.vmem %s0, %s406
      %p408 = scmp.lt.s32.totalorder %s23, 1
      %s409 = scalar_select %p408, %s23, 1
      %s410 = smul.addr %s409, 2
      %s411 = scalar_lea.vmem %s12, %s410
      %v413 = vld [vmem:[%s407] sm:$0xf]
      %v414 = vld [vmem:[%s407 + $0x4] sm:$0xf]
      %v415 = vld [vmem:[%s1] sm:$0xf]
      %v418 = vunpack.c.l.b16 %v413
      %v419 = vunpack.c.l.b16 %v414
      %v420 = vpack.c.b16 %v419, %v418
      %vm422 = vcmask 130048
      %v424 = vsel %vm422, %v415, 0
      %426 = vmatprep.subr.bf16.mxu0 0
      %427 = vmatpush1.bf16.msra.mxu0 0
      %428 = vmatprep.subr.bf16.mxu0 0
      %429 = vmatpush1.bf16.msra.mxu0 0
      %430 = vmatprep.subr.bf16.mxu0 0
      %431 = vmatpush1.bf16.msra.mxu0 0
      %432 = vmatprep.subr.bf16.mxu0 0
      %433 = vmatpush1.bf16.msra.mxu0 0
      %434 = vmatprep.subr.bf16.mxu0 0
      %435 = vmatpush1.bf16.msra.mxu0 0
      %436 = vmatprep.subr.bf16.mxu0 0
      %437 = vmatpush1.bf16.msra.mxu0 0
      %438 = vmatprep.subr.bf16.mxu0 0
      %439 = vmatpush1.bf16.msra.mxu0 0
      %440 = vmatprep.subr.bf16.mxu0 0
      %441 = vmatpush1.bf16.msra.mxu0 %v420
      %442 = vmatprep.subr.bf16.mxu0 0
      %443 = vmatpush2.bf16.msra.mxu0 0
      %444 = vmatprep.subr.bf16.mxu0 0
      %445 = vmatpush2.bf16.msra.mxu0 0
      %446 = vmatprep.subr.bf16.mxu0 0
      %447 = vmatpush2.bf16.msra.mxu0 0
      %448 = vmatprep.subr.bf16.mxu0 0
      %449 = vmatpush2.bf16.msra.mxu0 0
      %450 = vmatprep.subr.bf16.mxu0 0
      %451 = vmatpush2.bf16.msra.mxu0 0
      %452 = vmatprep.subr.bf16.mxu0 0
      %453 = vmatpush2.bf16.msra.mxu0 0
      %454 = vmatprep.subr.bf16.mxu0 0
      %455 = vmatpush2.bf16.msra.mxu0 0
      %456 = vmatprep.subr.bf16.mxu0 0
      %457 = vmatpush2.bf16.msra.mxu0 0
      %458 = vmatprep.mubr.bf16.mxu0 0
      %459 = vmatmul.mubr.bf16.gmra.mxu0 %v424
      %v460 = vpop.f32.mrf.mxu0
      %v461 = vadd.f32 0.0, %v460
      %v462 = vpop.f32.mrf.mxu0
      %v463 = vpop.f32.mrf.mxu0
      %v464 = vpop.f32.mrf.mxu0
      %465 = vdwg.mxu0
      %v466 = vpack.c.bf16 %v461, %v461
      %s467 = scalar_lea.vmem %s1, 4
      %v468 = vld [vmem:[%s467] sm:$0xf]
      %v470 = vsel %vm422, %v468, 0
      %472 = vmatprep.subr.bf16.mxu0 0
      %473 = vmatpush1.bf16.msra.mxu0 0
      %474 = vmatprep.subr.bf16.mxu0 0
      %475 = vmatpush1.bf16.msra.mxu0 0
      %476 = vmatprep.subr.bf16.mxu0 0
      %477 = vmatpush1.bf16.msra.mxu0 0
      %478 = vmatprep.subr.bf16.mxu0 0
      %479 = vmatpush1.bf16.msra.mxu0 0
      %480 = vmatprep.subr.bf16.mxu0 0
      %481 = vmatpush1.bf16.msra.mxu0 0
      %482 = vmatprep.subr.bf16.mxu0 0
      %483 = vmatpush1.bf16.msra.mxu0 0
      %484 = vmatprep.subr.bf16.mxu0 0
      %485 = vmatpush1.bf16.msra.mxu0 0
      %486 = vmatprep.subr.bf16.mxu0 0
      %487 = vmatpush1.bf16.msra.mxu0 %v420
      %488 = vmatprep.subr.bf16.mxu0 0
      %489 = vmatpush2.bf16.msra.mxu0 0
      %490 = vmatprep.subr.bf16.mxu0 0
      %491 = vmatpush2.bf16.msra.mxu0 0
      %492 = vmatprep.subr.bf16.mxu0 0
      %493 = vmatpush2.bf16.msra.mxu0 0
      %494 = vmatprep.subr.bf16.mxu0 0
      %495 = vmatpush2.bf16.msra.mxu0 0
      %496 = vmatprep.subr.bf16.mxu0 0
      %497 = vmatpush2.bf16.msra.mxu0 0
      %498 = vmatprep.subr.bf16.mxu0 0
      %499 = vmatpush2.bf16.msra.mxu0 0
      %500 = vmatprep.subr.bf16.mxu0 0
      %501 = vmatpush2.bf16.msra.mxu0 0
      %502 = vmatprep.subr.bf16.mxu0 0
      %503 = vmatpush2.bf16.msra.mxu0 0
      %504 = vmatprep.mubr.bf16.mxu0 0
      %505 = vmatmul.mubr.bf16.gmra.mxu0 %v470
      %v506 = vpop.f32.mrf.mxu0
      %v507 = vadd.f32 0.0, %v506
      %v508 = vpop.f32.mrf.mxu0
      %v509 = vpop.f32.mrf.mxu0
      %v510 = vpop.f32.mrf.mxu0
      %511 = vdwg.mxu0
      %v512 = vpack.c.bf16 %v507, %v507
      %s513 = scalar_lea.vmem %s1, 8
      %v514 = vld [vmem:[%s513] sm:$0xf]
      %v516 = vsel %vm422, %v514, 0
      %518 = vmatprep.subr.bf16.mxu0 0
      %519 = vmatpush1.bf16.msra.mxu0 0
      %520 = vmatprep.subr.bf16.mxu0 0
      %521 = vmatpush1.bf16.msra.mxu0 0
      %522 = vmatprep.subr.bf16.mxu0 0
      %523 = vmatpush1.bf16.msra.mxu0 0
      %524 = vmatprep.subr.bf16.mxu0 0
      %525 = vmatpush1.bf16.msra.mxu0 0
      %526 = vmatprep.subr.bf16.mxu0 0
      %527 = vmatpush1.bf16.msra.mxu0 0
      %528 = vmatprep.subr.bf16.mxu0 0
      %529 = vmatpush1.bf16.msra.mxu0 0
      %530 = vmatprep.subr.bf16.mxu0 0
      %531 = vmatpush1.bf16.msra.mxu0 0
      %532 = vmatprep.subr.bf16.mxu0 0
      %533 = vmatpush1.bf16.msra.mxu0 %v420
      %534 = vmatprep.subr.bf16.mxu0 0
      %535 = vmatpush2.bf16.msra.mxu0 0
      %536 = vmatprep.subr.bf16.mxu0 0
      %537 = vmatpush2.bf16.msra.mxu0 0
      %538 = vmatprep.subr.bf16.mxu0 0
      %539 = vmatpush2.bf16.msra.mxu0 0
      %540 = vmatprep.subr.bf16.mxu0 0
      %541 = vmatpush2.bf16.msra.mxu0 0
      %542 = vmatprep.subr.bf16.mxu0 0
      %543 = vmatpush2.bf16.msra.mxu0 0
      %544 = vmatprep.subr.bf16.mxu0 0
      %545 = vmatpush2.bf16.msra.mxu0 0
      %546 = vmatprep.subr.bf16.mxu0 0
      %547 = vmatpush2.bf16.msra.mxu0 0
      %548 = vmatprep.subr.bf16.mxu0 0
      %549 = vmatpush2.bf16.msra.mxu0 0
      %550 = vmatprep.mubr.bf16.mxu0 0
      %551 = vmatmul.mubr.bf16.gmra.mxu0 %v516
      %v552 = vpop.f32.mrf.mxu0
      %v553 = vadd.f32 0.0, %v552
      %v554 = vpop.f32.mrf.mxu0
      %v555 = vpop.f32.mrf.mxu0
      %v556 = vpop.f32.mrf.mxu0
      %557 = vdwg.mxu0
      %v558 = vpack.c.bf16 %v553, %v553
      %s559 = scalar_lea.vmem %s1, 12
      %v560 = vld [vmem:[%s559] sm:$0xf]
      %v562 = vsel %vm422, %v560, 0
      %564 = vmatprep.subr.bf16.mxu0 0
      %565 = vmatpush1.bf16.msra.mxu0 0
      %566 = vmatprep.subr.bf16.mxu0 0
      %567 = vmatpush1.bf16.msra.mxu0 0
      %568 = vmatprep.subr.bf16.mxu0 0
      %569 = vmatpush1.bf16.msra.mxu0 0
      %570 = vmatprep.subr.bf16.mxu0 0
      %571 = vmatpush1.bf16.msra.mxu0 0
      %572 = vmatprep.subr.bf16.mxu0 0
      %573 = vmatpush1.bf16.msra.mxu0 0
      %574 = vmatprep.subr.bf16.mxu0 0
      %575 = vmatpush1.bf16.msra.mxu0 0
      %576 = vmatprep.subr.bf16.mxu0 0
      %577 = vmatpush1.bf16.msra.mxu0 0
      %578 = vmatprep.subr.bf16.mxu0 0
      %579 = vmatpush1.bf16.msra.mxu0 %v420
      %580 = vmatprep.subr.bf16.mxu0 0
      %581 = vmatpush2.bf16.msra.mxu0 0
      %582 = vmatprep.subr.bf16.mxu0 0
      %583 = vmatpush2.bf16.msra.mxu0 0
      %584 = vmatprep.subr.bf16.mxu0 0
      %585 = vmatpush2.bf16.msra.mxu0 0
      %586 = vmatprep.subr.bf16.mxu0 0
      %587 = vmatpush2.bf16.msra.mxu0 0
      %588 = vmatprep.subr.bf16.mxu0 0
      %589 = vmatpush2.bf16.msra.mxu0 0
      %590 = vmatprep.subr.bf16.mxu0 0
      %591 = vmatpush2.bf16.msra.mxu0 0
      %592 = vmatprep.subr.bf16.mxu0 0
      %593 = vmatpush2.bf16.msra.mxu0 0
      %594 = vmatprep.subr.bf16.mxu0 0
      %595 = vmatpush2.bf16.msra.mxu0 0
      %596 = vmatprep.mubr.bf16.mxu0 0
      %597 = vmatmul.mubr.bf16.gmra.mxu0 %v562
      %v598 = vpop.f32.mrf.mxu0
      %v599 = vadd.f32 0.0, %v598
      %v600 = vpop.f32.mrf.mxu0
      %v601 = vpop.f32.mrf.mxu0
      %v602 = vpop.f32.mrf.mxu0
      %603 = vdwg.mxu0
      %v604 = vpack.c.bf16 %v599, %v599
      %v605 = vld [vmem:[%s2] sm:$0xff]
      %v606 = vld [vmem:[%s2 + $0x8] sm:$0xff]
      %v607 = vld [vmem:[%s2 + $0x10] sm:$0xff]
      %v608 = vld [vmem:[%s2 + $0x18] sm:$0xff]
      %v609 = vld [vmem:[%s2 + $0x20] sm:$0xff]
      %v610 = vld [vmem:[%s2 + $0x28] sm:$0xff]
      %v611 = vld [vmem:[%s2 + $0x30] sm:$0xff]
      %v612 = vld [vmem:[%s2 + $0x38] sm:$0xff]
      %v613 = vld [vmem:[%s2 + $0x40] sm:$0xff]
      %v614 = vld [vmem:[%s2 + $0x48] sm:$0xff]
      %v615 = vld [vmem:[%s2 + $0x50] sm:$0xff]
      %v616 = vld [vmem:[%s2 + $0x58] sm:$0xff]
      %v617 = vld [vmem:[%s2 + $0x60] sm:$0xff]
      %v618 = vld [vmem:[%s2 + $0x68] sm:$0xff]
      %v619 = vld [vmem:[%s2 + $0x70] sm:$0xff]
      %v620 = vld [vmem:[%s2 + $0x78] sm:$0xff]
      %v621 = vld [vmem:[%s2 + $0x80] sm:$0xff]
      %v622 = vld [vmem:[%s2 + $0x88] sm:$0xff]
      %v623 = vld [vmem:[%s2 + $0x90] sm:$0xff]
      %v624 = vld [vmem:[%s2 + $0x98] sm:$0xff]
      %v625 = vld [vmem:[%s2 + $0xa0] sm:$0xff]
      %v626 = vld [vmem:[%s2 + $0xa8] sm:$0xff]
      %v627 = vld [vmem:[%s2 + $0xb0] sm:$0xff]
      %v628 = vld [vmem:[%s2 + $0xb8] sm:$0xff]
      %v629 = vld [vmem:[%s2 + $0xc0] sm:$0xff]
      %v630 = vld [vmem:[%s2 + $0xc8] sm:$0xff]
      %v631 = vld [vmem:[%s2 + $0xd0] sm:$0xff]
      %v632 = vld [vmem:[%s2 + $0xd8] sm:$0xff]
      %v633 = vld [vmem:[%s2 + $0xe0] sm:$0xff]
      %v634 = vld [vmem:[%s2 + $0xe8] sm:$0xff]
      %v635 = vld [vmem:[%s2 + $0xf0] sm:$0xff]
      %v636 = vld [vmem:[%s2 + $0xf8] sm:$0xff]
      %v637 = vld [vmem:[%s2 + $0x100] sm:$0xff]
      %v638 = vld [vmem:[%s2 + $0x108] sm:$0xff]
      %v639 = vld [vmem:[%s2 + $0x110] sm:$0xff]
      %v640 = vld [vmem:[%s2 + $0x118] sm:$0xff]
      %v641 = vld [vmem:[%s2 + $0x120] sm:$0xff]
      %v642 = vld [vmem:[%s2 + $0x128] sm:$0xff]
      %v643 = vld [vmem:[%s2 + $0x130] sm:$0xff]
      %v644 = vld [vmem:[%s2 + $0x138] sm:$0xff]
      %v645 = vld [vmem:[%s2 + $0x140] sm:$0xff]
      %v646 = vld [vmem:[%s2 + $0x148] sm:$0xff]
      %v647 = vld [vmem:[%s2 + $0x150] sm:$0xff]
      %v648 = vld [vmem:[%s2 + $0x158] sm:$0xff]
      %v649 = vld [vmem:[%s2 + $0x160] sm:$0xff]
      %v650 = vld [vmem:[%s2 + $0x168] sm:$0xff]
      %v651 = vld [vmem:[%s2 + $0x170] sm:$0xff]
      %v652 = vld [vmem:[%s2 + $0x178] sm:$0xff]
      %v653 = vld [vmem:[%s2 + $0x180] sm:$0xff]
      %v654 = vld [vmem:[%s2 + $0x188] sm:$0xff]
      %v655 = vld [vmem:[%s2 + $0x190] sm:$0xff]
      %v656 = vld [vmem:[%s2 + $0x198] sm:$0xff]
      %v657 = vld [vmem:[%s2 + $0x1a0] sm:$0xff]
      %v658 = vld [vmem:[%s2 + $0x1a8] sm:$0xff]
      %v659 = vld [vmem:[%s2 + $0x1b0] sm:$0xff]
      %v660 = vld [vmem:[%s2 + $0x1b8] sm:$0xff]
      %v661 = vld [vmem:[%s2 + $0x1c0] sm:$0xff]
      %v662 = vld [vmem:[%s2 + $0x1c8] sm:$0xff]
      %v663 = vld [vmem:[%s2 + $0x1d0] sm:$0xff]
      %v664 = vld [vmem:[%s2 + $0x1d8] sm:$0xff]
      %v665 = vld [vmem:[%s2 + $0x1e0] sm:$0xff]
      %v666 = vld [vmem:[%s2 + $0x1e8] sm:$0xff]
      %v667 = vld [vmem:[%s2 + $0x1f0] sm:$0xff]
      %v668 = vld [vmem:[%s2 + $0x1f8] sm:$0xff]
      %v669 = vld [vmem:[%s3] sm:$0x3]
      %v671 = vlaneseq
      %v672 = vshrl.u32 %v671, 7
      %v673 = vsub.s32 0, %v672
      %v674 = vrot.slane %v669, %v673
      %v675 = vlaneseq
      %v676 = vshrl.u32 %v675, 7
      %v677 = vsub.s32 1, %v676
      %v678 = vrot.slane %v669, %v677
      %v745 = vunpack.c.l.b16 %v605
      %v746 = vunpack.c.h.b16 %v605
      %v747 = vunpack.c.l.b16 %v606
      %v748 = vunpack.c.h.b16 %v606
      %v749 = vunpack.c.l.b16 %v607
      %v750 = vunpack.c.h.b16 %v607
      %v751 = vunpack.c.l.b16 %v608
      %v752 = vunpack.c.h.b16 %v608
      %v753 = vunpack.c.l.b16 %v609
      %v754 = vunpack.c.h.b16 %v609
      %v755 = vunpack.c.l.b16 %v610
      %v756 = vunpack.c.h.b16 %v610
      %v757 = vunpack.c.l.b16 %v611
      %v758 = vunpack.c.h.b16 %v611
      %v759 = vunpack.c.l.b16 %v612
      %v760 = vunpack.c.h.b16 %v612
      %v761 = vunpack.c.l.b16 %v613
      %v762 = vunpack.c.h.b16 %v613
      %v763 = vunpack.c.l.b16 %v614
      %v764 = vunpack.c.h.b16 %v614
      %v765 = vunpack.c.l.b16 %v615
      %v766 = vunpack.c.h.b16 %v615
      %v767 = vunpack.c.l.b16 %v616
      %v768 = vunpack.c.h.b16 %v616
      %v769 = vunpack.c.l.b16 %v617
      %v770 = vunpack.c.h.b16 %v617
      %v771 = vunpack.c.l.b16 %v618
      %v772 = vunpack.c.h.b16 %v618
      %v773 = vunpack.c.l.b16 %v619
      %v774 = vunpack.c.h.b16 %v619
      %v775 = vunpack.c.l.b16 %v620
      %v776 = vunpack.c.h.b16 %v620
      %v777 = vunpack.c.l.b16 %v621
      %v778 = vunpack.c.h.b16 %v621
      %v779 = vunpack.c.l.b16 %v622
      %v780 = vunpack.c.h.b16 %v622
      %v781 = vunpack.c.l.b16 %v623
      %v782 = vunpack.c.h.b16 %v623
      %v783 = vunpack.c.l.b16 %v624
      %v784 = vunpack.c.h.b16 %v624
      %v785 = vunpack.c.l.b16 %v625
      %v786 = vunpack.c.h.b16 %v625
      %v787 = vunpack.c.l.b16 %v626
      %v788 = vunpack.c.h.b16 %v626
      %v789 = vunpack.c.l.b16 %v627
      %v790 = vunpack.c.h.b16 %v627
      %v791 = vunpack.c.l.b16 %v628
      %v792 = vunpack.c.h.b16 %v628
      %v793 = vunpack.c.l.b16 %v629
      %v794 = vunpack.c.h.b16 %v629
      %v795 = vunpack.c.l.b16 %v630
      %v796 = vunpack.c.h.b16 %v630
      %v797 = vunpack.c.l.b16 %v631
      %v798 = vunpack.c.h.b16 %v631
      %v799 = vunpack.c.l.b16 %v632
      %v800 = vunpack.c.h.b16 %v632
      %v801 = vunpack.c.l.b16 %v633
      %v802 = vunpack.c.h.b16 %v633
      %v803 = vunpack.c.l.b16 %v634
      %v804 = vunpack.c.h.b16 %v634
      %v805 = vunpack.c.l.b16 %v635
      %v806 = vunpack.c.h.b16 %v635
      %v807 = vunpack.c.l.b16 %v636
      %v808 = vunpack.c.h.b16 %v636
      %v809 = vunpack.c.l.b16 %v637
      %v810 = vunpack.c.h.b16 %v637
      %v811 = vunpack.c.l.b16 %v638
      %v812 = vunpack.c.h.b16 %v638
      %v813 = vunpack.c.l.b16 %v639
      %v814 = vunpack.c.h.b16 %v639
      %v815 = vunpack.c.l.b16 %v640
      %v816 = vunpack.c.h.b16 %v640
      %v817 = vunpack.c.l.b16 %v641
      %v818 = vunpack.c.h.b16 %v641
      %v819 = vunpack.c.l.b16 %v642
      %v820 = vunpack.c.h.b16 %v642
      %v821 = vunpack.c.l.b16 %v643
      %v822 = vunpack.c.h.b16 %v643
      %v823 = vunpack.c.l.b16 %v644
      %v824 = vunpack.c.h.b16 %v644
      %v825 = vunpack.c.l.b16 %v645
      %v826 = vunpack.c.h.b16 %v645
      %v827 = vunpack.c.l.b16 %v646
      %v828 = vunpack.c.h.b16 %v646
      %v829 = vunpack.c.l.b16 %v647
      %v830 = vunpack.c.h.b16 %v647
      %v831 = vunpack.c.l.b16 %v648
      %v832 = vunpack.c.h.b16 %v648
      %v833 = vunpack.c.l.b16 %v649
      %v834 = vunpack.c.h.b16 %v649
      %v835 = vunpack.c.l.b16 %v650
      %v836 = vunpack.c.h.b16 %v650
      %v837 = vunpack.c.l.b16 %v651
      %v838 = vunpack.c.h.b16 %v651
      %v839 = vunpack.c.l.b16 %v652
      %v840 = vunpack.c.h.b16 %v652
      %v841 = vunpack.c.l.b16 %v653
      %v842 = vunpack.c.h.b16 %v653
      %v843 = vunpack.c.l.b16 %v654
      %v844 = vunpack.c.h.b16 %v654
      %v845 = vunpack.c.l.b16 %v655
      %v846 = vunpack.c.h.b16 %v655
      %v847 = vunpack.c.l.b16 %v656
      %v848 = vunpack.c.h.b16 %v656
      %v849 = vunpack.c.l.b16 %v657
      %v850 = vunpack.c.h.b16 %v657
      %v851 = vunpack.c.l.b16 %v658
      %v852 = vunpack.c.h.b16 %v658
      %v853 = vunpack.c.l.b16 %v659
      %v854 = vunpack.c.h.b16 %v659
      %v855 = vunpack.c.l.b16 %v660
      %v856 = vunpack.c.h.b16 %v660
      %v857 = vunpack.c.l.b16 %v661
      %v858 = vunpack.c.h.b16 %v661
      %v859 = vunpack.c.l.b16 %v662
      %v860 = vunpack.c.h.b16 %v662
      %v861 = vunpack.c.l.b16 %v663
      %v862 = vunpack.c.h.b16 %v663
      %v863 = vunpack.c.l.b16 %v664
      %v864 = vunpack.c.h.b16 %v664
      %v865 = vunpack.c.l.b16 %v665
      %v866 = vunpack.c.h.b16 %v665
      %v867 = vunpack.c.l.b16 %v666
      %v868 = vunpack.c.h.b16 %v666
      %v869 = vunpack.c.l.b16 %v667
      %v870 = vunpack.c.h.b16 %v667
      %v871 = vunpack.c.l.b16 %v668
      %v872 = vunpack.c.h.b16 %v668
      %v873 = vpack.c.b16 %v747, %v745
      %v874 = vpack.c.b16 %v748, %v746
      %v875 = vpack.c.b16 %v751, %v749
      %v876 = vpack.c.b16 %v752, %v750
      %v877 = vpack.c.b16 %v755, %v753
      %v878 = vpack.c.b16 %v756, %v754
      %v879 = vpack.c.b16 %v759, %v757
      %v880 = vpack.c.b16 %v760, %v758
      %v881 = vpack.c.b16 %v763, %v761
      %v882 = vpack.c.b16 %v764, %v762
      %v883 = vpack.c.b16 %v767, %v765
      %v884 = vpack.c.b16 %v768, %v766
      %v885 = vpack.c.b16 %v771, %v769
      %v886 = vpack.c.b16 %v772, %v770
      %v887 = vpack.c.b16 %v775, %v773
      %v888 = vpack.c.b16 %v776, %v774
      %v889 = vpack.c.b16 %v779, %v777
      %v890 = vpack.c.b16 %v780, %v778
      %v891 = vpack.c.b16 %v783, %v781
      %v892 = vpack.c.b16 %v784, %v782
      %v893 = vpack.c.b16 %v787, %v785
      %v894 = vpack.c.b16 %v788, %v786
      %v895 = vpack.c.b16 %v791, %v789
      %v896 = vpack.c.b16 %v792, %v790
      %v897 = vpack.c.b16 %v795, %v793
      %v898 = vpack.c.b16 %v796, %v794
      %v899 = vpack.c.b16 %v799, %v797
      %v900 = vpack.c.b16 %v800, %v798
      %v901 = vpack.c.b16 %v803, %v801
      %v902 = vpack.c.b16 %v804, %v802
      %v903 = vpack.c.b16 %v807, %v805
      %v904 = vpack.c.b16 %v808, %v806
      %v905 = vpack.c.b16 %v811, %v809
      %v906 = vpack.c.b16 %v812, %v810
      %v907 = vpack.c.b16 %v815, %v813
      %v908 = vpack.c.b16 %v816, %v814
      %v909 = vpack.c.b16 %v819, %v817
      %v910 = vpack.c.b16 %v820, %v818
      %v911 = vpack.c.b16 %v823, %v821
      %v912 = vpack.c.b16 %v824, %v822
      %v913 = vpack.c.b16 %v827, %v825
      %v914 = vpack.c.b16 %v828, %v826
      %v915 = vpack.c.b16 %v831, %v829
      %v916 = vpack.c.b16 %v832, %v830
      %v917 = vpack.c.b16 %v835, %v833
      %v918 = vpack.c.b16 %v836, %v834
      %v919 = vpack.c.b16 %v839, %v837
      %v920 = vpack.c.b16 %v840, %v838
      %v921 = vpack.c.b16 %v843, %v841
      %v922 = vpack.c.b16 %v844, %v842
      %v923 = vpack.c.b16 %v847, %v845
      %v924 = vpack.c.b16 %v848, %v846
      %v925 = vpack.c.b16 %v851, %v849
      %v926 = vpack.c.b16 %v852, %v850
      %v927 = vpack.c.b16 %v855, %v853
      %v928 = vpack.c.b16 %v856, %v854
      %v929 = vpack.c.b16 %v859, %v857
      %v930 = vpack.c.b16 %v860, %v858
      %v931 = vpack.c.b16 %v863, %v861
      %v932 = vpack.c.b16 %v864, %v862
      %v933 = vpack.c.b16 %v867, %v865
      %v934 = vpack.c.b16 %v868, %v866
      %v935 = vpack.c.b16 %v871, %v869
      %v936 = vpack.c.b16 %v872, %v870
      %1001 = vmatprep.subr.bf16.mxu0 %v888
      %1002 = vmatpush1.bf16.msra.mxu0 %v887
      %1003 = vmatprep.subr.bf16.mxu0 %v886
      %1004 = vmatpush1.bf16.msra.mxu0 %v885
      %1005 = vmatprep.subr.bf16.mxu0 %v884
      %1006 = vmatpush1.bf16.msra.mxu0 %v883
      %1007 = vmatprep.subr.bf16.mxu0 %v882
      %1008 = vmatpush1.bf16.msra.mxu0 %v881
      %1009 = vmatprep.subr.bf16.mxu0 %v880
      %1010 = vmatpush1.bf16.msra.mxu0 %v879
      %1011 = vmatprep.subr.bf16.mxu0 %v878
      %1012 = vmatpush1.bf16.msra.mxu0 %v877
      %1013 = vmatprep.subr.bf16.mxu0 %v876
      %1014 = vmatpush1.bf16.msra.mxu0 %v875
      %1015 = vmatprep.subr.bf16.mxu0 %v874
      %1016 = vmatpush1.bf16.msra.mxu0 %v873
      %1017 = vmatprep.subr.bf16.mxu0 %v904
      %1018 = vmatpush2.bf16.msra.mxu0 %v903
      %1019 = vmatprep.subr.bf16.mxu0 %v902
      %1020 = vmatpush2.bf16.msra.mxu0 %v901
      %1021 = vmatprep.subr.bf16.mxu0 %v900
      %1022 = vmatpush2.bf16.msra.mxu0 %v899
      %1023 = vmatprep.subr.bf16.mxu0 %v898
      %1024 = vmatpush2.bf16.msra.mxu0 %v897
      %1025 = vmatprep.subr.bf16.mxu0 %v896
      %1026 = vmatpush2.bf16.msra.mxu0 %v895
      %1027 = vmatprep.subr.bf16.mxu0 %v894
      %1028 = vmatpush2.bf16.msra.mxu0 %v893
      %1029 = vmatprep.subr.bf16.mxu0 %v892
      %1030 = vmatpush2.bf16.msra.mxu0 %v891
      %1031 = vmatprep.subr.bf16.mxu0 %v890
      %1032 = vmatpush2.bf16.msra.mxu0 %v889
      %1033 = vmatprep.mubr.bf16.mxu0 %v512
      %1034 = vmatmul.mubr.bf16.gmra.mxu0 %v466
      %v1035 = vpop.f32.mrf.mxu0
      %v1036 = vadd.f32 %v674, %v1035
      %v1037 = vpop.f32.mrf.mxu0
      %v1038 = vadd.f32 %v678, %v1037
      %v1039 = vpop.f32.mrf.mxu0
      %v1040 = vpop.f32.mrf.mxu0
      %1041 = vdwg.mxu0
      %1042 = vmatprep.subr.bf16.mxu0 %v920
      %1043 = vmatpush1.bf16.msra.mxu0 %v919
      %1044 = vmatprep.subr.bf16.mxu0 %v918
      %1045 = vmatpush1.bf16.msra.mxu0 %v917
      %1046 = vmatprep.subr.bf16.mxu0 %v916
      %1047 = vmatpush1.bf16.msra.mxu0 %v915
      %1048 = vmatprep.subr.bf16.mxu0 %v914
      %1049 = vmatpush1.bf16.msra.mxu0 %v913
      %1050 = vmatprep.subr.bf16.mxu0 %v912
      %1051 = vmatpush1.bf16.msra.mxu0 %v911
      %1052 = vmatprep.subr.bf16.mxu0 %v910
      %1053 = vmatpush1.bf16.msra.mxu0 %v909
      %1054 = vmatprep.subr.bf16.mxu0 %v908
      %1055 = vmatpush1.bf16.msra.mxu0 %v907
      %1056 = vmatprep.subr.bf16.mxu0 %v906
      %1057 = vmatpush1.bf16.msra.mxu0 %v905
      %1058 = vmatprep.subr.bf16.mxu0 %v936
      %1059 = vmatpush2.bf16.msra.mxu0 %v935
      %1060 = vmatprep.subr.bf16.mxu0 %v934
      %1061 = vmatpush2.bf16.msra.mxu0 %v933
      %1062 = vmatprep.subr.bf16.mxu0 %v932
      %1063 = vmatpush2.bf16.msra.mxu0 %v931
      %1064 = vmatprep.subr.bf16.mxu0 %v930
      %1065 = vmatpush2.bf16.msra.mxu0 %v929
      %1066 = vmatprep.subr.bf16.mxu0 %v928
      %1067 = vmatpush2.bf16.msra.mxu0 %v927
      %1068 = vmatprep.subr.bf16.mxu0 %v926
      %1069 = vmatpush2.bf16.msra.mxu0 %v925
      %1070 = vmatprep.subr.bf16.mxu0 %v924
      %1071 = vmatpush2.bf16.msra.mxu0 %v923
      %1072 = vmatprep.subr.bf16.mxu0 %v922
      %1073 = vmatpush2.bf16.msra.mxu0 %v921
      %1074 = vmatprep.mubr.bf16.mxu0 %v604
      %1075 = vmatmul.mubr.bf16.gmra.mxu0 %v558
      %v1076 = vpop.f32.mrf.mxu0
      %v1077 = vadd.f32 %v1036, %v1076
      %v1078 = vpop.f32.mrf.mxu0
      %v1079 = vadd.f32 %v1038, %v1078
      %v1080 = vpop.f32.mrf.mxu0
      %v1081 = vpop.f32.mrf.mxu0
      %1082 = vdwg.mxu0
      %v1083 = vmax.f32 %v1077, 0.0
      %v1084 = vmax.f32 %v1079, 0.0
      %v1085 = vpack.c.bf16 %v1083, %v1083
      %v1086 = vpack.c.bf16 %v1084, %v1084
      %v1087 = vld [vmem:[%s4] sm:$0x3]
      %vm1088 = vcmask 64512
      %v1090 = vsel %vm1088, %v1087, 0
      %vm1092 = vcmask 1043456
      %v1094 = vsel %vm1092, %v1085, 0
      %v1097 = vsel %vm1092, %v1086, 0
      %1099 = vmatprep.subr.bf16.mxu0 0
      %1100 = vmatpush1.bf16.msra.mxu0 0
      %1101 = vmatprep.subr.bf16.mxu0 0
      %1102 = vmatpush1.bf16.msra.mxu0 0
      %1103 = vmatprep.subr.bf16.mxu0 0
      %1104 = vmatpush1.bf16.msra.mxu0 0
      %1105 = vmatprep.subr.bf16.mxu0 0
      %1106 = vmatpush1.bf16.msra.mxu0 0
      %1107 = vmatprep.subr.bf16.mxu0 0
      %1108 = vmatpush1.bf16.msra.mxu0 0
      %1109 = vmatprep.subr.bf16.mxu0 0
      %1110 = vmatpush1.bf16.msra.mxu0 0
      %1111 = vmatprep.subr.bf16.mxu0 0
      %1112 = vmatpush1.bf16.msra.mxu0 0
      %1113 = vmatprep.subr.bf16.mxu0 %v1097
      %1114 = vmatpush1.bf16.msra.mxu0 %v1094
      %1115 = vmatprep.subr.bf16.mxu0 0
      %1116 = vmatpush2.bf16.msra.mxu0 0
      %1117 = vmatprep.subr.bf16.mxu0 0
      %1118 = vmatpush2.bf16.msra.mxu0 0
      %1119 = vmatprep.subr.bf16.mxu0 0
      %1120 = vmatpush2.bf16.msra.mxu0 0
      %1121 = vmatprep.subr.bf16.mxu0 0
      %1122 = vmatpush2.bf16.msra.mxu0 0
      %1123 = vmatprep.subr.bf16.mxu0 0
      %1124 = vmatpush2.bf16.msra.mxu0 0
      %1125 = vmatprep.subr.bf16.mxu0 0
      %1126 = vmatpush2.bf16.msra.mxu0 0
      %1127 = vmatprep.subr.bf16.mxu0 0
      %1128 = vmatpush2.bf16.msra.mxu0 0
      %1129 = vmatprep.subr.bf16.mxu0 0
      %1130 = vmatpush2.bf16.msra.mxu0 0
      %1131 = vmatprep.mubr.bf16.mxu0 0
      %1132 = vmatmul.mubr.bf16.gmra.mxu0 %v1090
      %v1133 = vpop.f32.mrf.mxu0
      %v1134 = vadd.f32 0.0, %v1133
      %v1135 = vpop.f32.mrf.mxu0
      %v1136 = vadd.f32 0.0, %v1135
      %v1137 = vpop.f32.mrf.mxu0
      %v1138 = vpop.f32.mrf.mxu0
      %1139 = vdwg.mxu0
      %v1140 = vpack.c.bf16 %v1134, %v1134
      %v1141 = vpack.c.bf16 %v1136, %v1136
      %s1142 = scalar_lea.vmem %s4, 2
      %v1143 = vld [vmem:[%s1142] sm:$0x3]
      %v1145 = vsel %vm1088, %v1143, 0
      %1147 = vmatprep.subr.bf16.mxu0 0
      %1148 = vmatpush1.bf16.msra.mxu0 0
      %1149 = vmatprep.subr.bf16.mxu0 0
      %1150 = vmatpush1.bf16.msra.mxu0 0
      %1151 = vmatprep.subr.bf16.mxu0 0
      %1152 = vmatpush1.bf16.msra.mxu0 0
      %1153 = vmatprep.subr.bf16.mxu0 0
      %1154 = vmatpush1.bf16.msra.mxu0 0
      %1155 = vmatprep.subr.bf16.mxu0 0
      %1156 = vmatpush1.bf16.msra.mxu0 0
      %1157 = vmatprep.subr.bf16.mxu0 0
      %1158 = vmatpush1.bf16.msra.mxu0 0
      %1159 = vmatprep.subr.bf16.mxu0 0
      %1160 = vmatpush1.bf16.msra.mxu0 0
      %1161 = vmatprep.subr.bf16.mxu0 %v1097
      %1162 = vmatpush1.bf16.msra.mxu0 %v1094
      %1163 = vmatprep.subr.bf16.mxu0 0
      %1164 = vmatpush2.bf16.msra.mxu0 0
      %1165 = vmatprep.subr.bf16.mxu0 0
      %1166 = vmatpush2.bf16.msra.mxu0 0
      %1167 = vmatprep.subr.bf16.mxu0 0
      %1168 = vmatpush2.bf16.msra.mxu0 0
      %1169 = vmatprep.subr.bf16.mxu0 0
      %1170 = vmatpush2.bf16.msra.mxu0 0
      %1171 = vmatprep.subr.bf16.mxu0 0
      %1172 = vmatpush2.bf16.msra.mxu0 0
      %1173 = vmatprep.subr.bf16.mxu0 0
      %1174 = vmatpush2.bf16.msra.mxu0 0
      %1175 = vmatprep.subr.bf16.mxu0 0
      %1176 = vmatpush2.bf16.msra.mxu0 0
      %1177 = vmatprep.subr.bf16.mxu0 0
      %1178 = vmatpush2.bf16.msra.mxu0 0
      %1179 = vmatprep.mubr.bf16.mxu0 0
      %1180 = vmatmul.mubr.bf16.gmra.mxu0 %v1145
      %v1181 = vpop.f32.mrf.mxu0
      %v1182 = vadd.f32 0.0, %v1181
      %v1183 = vpop.f32.mrf.mxu0
      %v1184 = vadd.f32 0.0, %v1183
      %v1185 = vpop.f32.mrf.mxu0
      %v1186 = vpop.f32.mrf.mxu0
      %1187 = vdwg.mxu0
      %v1188 = vpack.c.bf16 %v1182, %v1182
      %v1189 = vpack.c.bf16 %v1184, %v1184
      %s1190 = scalar_lea.vmem %s4, 4
      %v1191 = vld [vmem:[%s1190] sm:$0x3]
      %v1193 = vsel %vm1088, %v1191, 0
      %1195 = vmatprep.subr.bf16.mxu0 0
      %1196 = vmatpush1.bf16.msra.mxu0 0
      %1197 = vmatprep.subr.bf16.mxu0 0
      %1198 = vmatpush1.bf16.msra.mxu0 0
      %1199 = vmatprep.subr.bf16.mxu0 0
      %1200 = vmatpush1.bf16.msra.mxu0 0
      %1201 = vmatprep.subr.bf16.mxu0 0
      %1202 = vmatpush1.bf16.msra.mxu0 0
      %1203 = vmatprep.subr.bf16.mxu0 0
      %1204 = vmatpush1.bf16.msra.mxu0 0
      %1205 = vmatprep.subr.bf16.mxu0 0
      %1206 = vmatpush1.bf16.msra.mxu0 0
      %1207 = vmatprep.subr.bf16.mxu0 0
      %1208 = vmatpush1.bf16.msra.mxu0 0
      %1209 = vmatprep.subr.bf16.mxu0 %v1097
      %1210 = vmatpush1.bf16.msra.mxu0 %v1094
      %1211 = vmatprep.subr.bf16.mxu0 0
      %1212 = vmatpush2.bf16.msra.mxu0 0
      %1213 = vmatprep.subr.bf16.mxu0 0
      %1214 = vmatpush2.bf16.msra.mxu0 0
      %1215 = vmatprep.subr.bf16.mxu0 0
      %1216 = vmatpush2.bf16.msra.mxu0 0
      %1217 = vmatprep.subr.bf16.mxu0 0
      %1218 = vmatpush2.bf16.msra.mxu0 0
      %1219 = vmatprep.subr.bf16.mxu0 0
      %1220 = vmatpush2.bf16.msra.mxu0 0
      %1221 = vmatprep.subr.bf16.mxu0 0
      %1222 = vmatpush2.bf16.msra.mxu0 0
      %1223 = vmatprep.subr.bf16.mxu0 0
      %1224 = vmatpush2.bf16.msra.mxu0 0
      %1225 = vmatprep.subr.bf16.mxu0 0
      %1226 = vmatpush2.bf16.msra.mxu0 0
      %1227 = vmatprep.mubr.bf16.mxu0 0
      %1228 = vmatmul.mubr.bf16.gmra.mxu0 %v1193
      %v1229 = vpop.f32.mrf.mxu0
      %v1230 = vadd.f32 0.0, %v1229
      %v1231 = vpop.f32.mrf.mxu0
      %v1232 = vadd.f32 0.0, %v1231
      %v1233 = vpop.f32.mrf.mxu0
      %v1234 = vpop.f32.mrf.mxu0
      %1235 = vdwg.mxu0
      %v1236 = vpack.c.bf16 %v1230, %v1230
      %v1237 = vpack.c.bf16 %v1232, %v1232
      %s1238 = scalar_lea.vmem %s4, 6
      %v1239 = vld [vmem:[%s1238] sm:$0x3]
      %v1241 = vsel %vm1088, %v1239, 0
      %1243 = vmatprep.subr.bf16.mxu0 0
      %1244 = vmatpush1.bf16.msra.mxu0 0
      %1245 = vmatprep.subr.bf16.mxu0 0
      %1246 = vmatpush1.bf16.msra.mxu0 0
      %1247 = vmatprep.subr.bf16.mxu0 0
      %1248 = vmatpush1.bf16.msra.mxu0 0
      %1249 = vmatprep.subr.bf16.mxu0 0
      %1250 = vmatpush1.bf16.msra.mxu0 0
      %1251 = vmatprep.subr.bf16.mxu0 0
      %1252 = vmatpush1.bf16.msra.mxu0 0
      %1253 = vmatprep.subr.bf16.mxu0 0
      %1254 = vmatpush1.bf16.msra.mxu0 0
      %1255 = vmatprep.subr.bf16.mxu0 0
      %1256 = vmatpush1.bf16.msra.mxu0 0
      %1257 = vmatprep.subr.bf16.mxu0 %v1097
      %1258 = vmatpush1.bf16.msra.mxu0 %v1094
      %1259 = vmatprep.subr.bf16.mxu0 0
      %1260 = vmatpush2.bf16.msra.mxu0 0
      %1261 = vmatprep.subr.bf16.mxu0 0
      %1262 = vmatpush2.bf16.msra.mxu0 0
      %1263 = vmatprep.subr.bf16.mxu0 0
      %1264 = vmatpush2.bf16.msra.mxu0 0
      %1265 = vmatprep.subr.bf16.mxu0 0
      %1266 = vmatpush2.bf16.msra.mxu0 0
      %1267 = vmatprep.subr.bf16.mxu0 0
      %1268 = vmatpush2.bf16.msra.mxu0 0
      %1269 = vmatprep.subr.bf16.mxu0 0
      %1270 = vmatpush2.bf16.msra.mxu0 0
      %1271 = vmatprep.subr.bf16.mxu0 0
      %1272 = vmatpush2.bf16.msra.mxu0 0
      %1273 = vmatprep.subr.bf16.mxu0 0
      %1274 = vmatpush2.bf16.msra.mxu0 0
      %1275 = vmatprep.mubr.bf16.mxu0 0
      %1276 = vmatmul.mubr.bf16.gmra.mxu0 %v1241
      %v1277 = vpop.f32.mrf.mxu0
      %v1278 = vadd.f32 0.0, %v1277
      %v1279 = vpop.f32.mrf.mxu0
      %v1280 = vadd.f32 0.0, %v1279
      %v1281 = vpop.f32.mrf.mxu0
      %v1282 = vpop.f32.mrf.mxu0
      %1283 = vdwg.mxu0
      %v1284 = vpack.c.bf16 %v1278, %v1278
      %v1285 = vpack.c.bf16 %v1280, %v1280
      %v1286 = vld [vmem:[%s5] sm:$0xf]
      %v1287 = vld [vmem:[%s5 + $0x4] sm:$0xf]
      %v1288 = vld [vmem:[%s5 + $0x8] sm:$0xf]
      %v1289 = vld [vmem:[%s5 + $0xc] sm:$0xf]
      %v1290 = vld [vmem:[%s5 + $0x10] sm:$0xf]
      %v1291 = vld [vmem:[%s5 + $0x14] sm:$0xf]
      %v1292 = vld [vmem:[%s5 + $0x18] sm:$0xf]
      %v1293 = vld [vmem:[%s5 + $0x1c] sm:$0xf]
      %v1294 = vld [vmem:[%s5 + $0x20] sm:$0xf]
      %v1295 = vld [vmem:[%s5 + $0x24] sm:$0xf]
      %v1296 = vld [vmem:[%s5 + $0x28] sm:$0xf]
      %v1297 = vld [vmem:[%s5 + $0x2c] sm:$0xf]
      %v1298 = vld [vmem:[%s5 + $0x30] sm:$0xf]
      %v1299 = vld [vmem:[%s5 + $0x34] sm:$0xf]
      %v1300 = vld [vmem:[%s5 + $0x38] sm:$0xf]
      %v1301 = vld [vmem:[%s5 + $0x3c] sm:$0xf]
      %v1302 = vld [vmem:[%s5 + $0x40] sm:$0xf]
      %v1303 = vld [vmem:[%s5 + $0x44] sm:$0xf]
      %v1304 = vld [vmem:[%s5 + $0x48] sm:$0xf]
      %v1305 = vld [vmem:[%s5 + $0x4c] sm:$0xf]
      %v1306 = vld [vmem:[%s5 + $0x50] sm:$0xf]
      %v1307 = vld [vmem:[%s5 + $0x54] sm:$0xf]
      %v1308 = vld [vmem:[%s5 + $0x58] sm:$0xf]
      %v1309 = vld [vmem:[%s5 + $0x5c] sm:$0xf]
      %v1310 = vld [vmem:[%s5 + $0x60] sm:$0xf]
      %v1311 = vld [vmem:[%s5 + $0x64] sm:$0xf]
      %v1312 = vld [vmem:[%s5 + $0x68] sm:$0xf]
      %v1313 = vld [vmem:[%s5 + $0x6c] sm:$0xf]
      %v1314 = vld [vmem:[%s5 + $0x70] sm:$0xf]
      %v1315 = vld [vmem:[%s5 + $0x74] sm:$0xf]
      %v1316 = vld [vmem:[%s5 + $0x78] sm:$0xf]
      %v1317 = vld [vmem:[%s5 + $0x7c] sm:$0xf]
      %v1318 = vld [vmem:[%s5 + $0x80] sm:$0xf]
      %v1319 = vld [vmem:[%s5 + $0x84] sm:$0xf]
      %v1320 = vld [vmem:[%s5 + $0x88] sm:$0xf]
      %v1321 = vld [vmem:[%s5 + $0x8c] sm:$0xf]
      %v1322 = vld [vmem:[%s5 + $0x90] sm:$0xf]
      %v1323 = vld [vmem:[%s5 + $0x94] sm:$0xf]
      %v1324 = vld [vmem:[%s5 + $0x98] sm:$0xf]
      %v1325 = vld [vmem:[%s5 + $0x9c] sm:$0xf]
      %v1326 = vld [vmem:[%s5 + $0xa0] sm:$0xf]
      %v1327 = vld [vmem:[%s5 + $0xa4] sm:$0xf]
      %v1328 = vld [vmem:[%s5 + $0xa8] sm:$0xf]
      %v1329 = vld [vmem:[%s5 + $0xac] sm:$0xf]
      %v1330 = vld [vmem:[%s5 + $0xb0] sm:$0xf]
      %v1331 = vld [vmem:[%s5 + $0xb4] sm:$0xf]
      %v1332 = vld [vmem:[%s5 + $0xb8] sm:$0xf]
      %v1333 = vld [vmem:[%s5 + $0xbc] sm:$0xf]
      %v1334 = vld [vmem:[%s5 + $0xc0] sm:$0xf]
      %v1335 = vld [vmem:[%s5 + $0xc4] sm:$0xf]
      %v1336 = vld [vmem:[%s5 + $0xc8] sm:$0xf]
      %v1337 = vld [vmem:[%s5 + $0xcc] sm:$0xf]
      %v1338 = vld [vmem:[%s5 + $0xd0] sm:$0xf]
      %v1339 = vld [vmem:[%s5 + $0xd4] sm:$0xf]
      %v1340 = vld [vmem:[%s5 + $0xd8] sm:$0xf]
      %v1341 = vld [vmem:[%s5 + $0xdc] sm:$0xf]
      %v1342 = vld [vmem:[%s5 + $0xe0] sm:$0xf]
      %v1343 = vld [vmem:[%s5 + $0xe4] sm:$0xf]
      %v1344 = vld [vmem:[%s5 + $0xe8] sm:$0xf]
      %v1345 = vld [vmem:[%s5 + $0xec] sm:$0xf]
      %v1346 = vld [vmem:[%s5 + $0xf0] sm:$0xf]
      %v1347 = vld [vmem:[%s5 + $0xf4] sm:$0xf]
      %v1348 = vld [vmem:[%s5 + $0xf8] sm:$0xf]
      %v1349 = vld [vmem:[%s5 + $0xfc] sm:$0xf]
      %v1350 = vld [vmem:[%s5 + $0x100] sm:$0xf]
      %v1351 = vld [vmem:[%s5 + $0x104] sm:$0xf]
      %v1352 = vld [vmem:[%s5 + $0x108] sm:$0xf]
      %v1353 = vld [vmem:[%s5 + $0x10c] sm:$0xf]
      %v1354 = vld [vmem:[%s5 + $0x110] sm:$0xf]
      %v1355 = vld [vmem:[%s5 + $0x114] sm:$0xf]
      %v1356 = vld [vmem:[%s5 + $0x118] sm:$0xf]
      %v1357 = vld [vmem:[%s5 + $0x11c] sm:$0xf]
      %v1358 = vld [vmem:[%s5 + $0x120] sm:$0xf]
      %v1359 = vld [vmem:[%s5 + $0x124] sm:$0xf]
      %v1360 = vld [vmem:[%s5 + $0x128] sm:$0xf]
      %v1361 = vld [vmem:[%s5 + $0x12c] sm:$0xf]
      %v1362 = vld [vmem:[%s5 + $0x130] sm:$0xf]
      %v1363 = vld [vmem:[%s5 + $0x134] sm:$0xf]
      %v1364 = vld [vmem:[%s5 + $0x138] sm:$0xf]
      %v1365 = vld [vmem:[%s5 + $0x13c] sm:$0xf]
      %v1366 = vld [vmem:[%s5 + $0x140] sm:$0xf]
      %v1367 = vld [vmem:[%s5 + $0x144] sm:$0xf]
      %v1368 = vld [vmem:[%s5 + $0x148] sm:$0xf]
      %v1369 = vld [vmem:[%s5 + $0x14c] sm:$0xf]
      %v1370 = vld [vmem:[%s5 + $0x150] sm:$0xf]
      %v1371 = vld [vmem:[%s5 + $0x154] sm:$0xf]
      %v1372 = vld [vmem:[%s5 + $0x158] sm:$0xf]
      %v1373 = vld [vmem:[%s5 + $0x15c] sm:$0xf]
      %v1374 = vld [vmem:[%s5 + $0x160] sm:$0xf]
      %v1375 = vld [vmem:[%s5 + $0x164] sm:$0xf]
      %v1376 = vld [vmem:[%s5 + $0x168] sm:$0xf]
      %v1377 = vld [vmem:[%s5 + $0x16c] sm:$0xf]
      %v1378 = vld [vmem:[%s5 + $0x170] sm:$0xf]
      %v1379 = vld [vmem:[%s5 + $0x174] sm:$0xf]
      %v1380 = vld [vmem:[%s5 + $0x178] sm:$0xf]
      %v1381 = vld [vmem:[%s5 + $0x17c] sm:$0xf]
      %v1382 = vld [vmem:[%s5 + $0x180] sm:$0xf]
      %v1383 = vld [vmem:[%s5 + $0x184] sm:$0xf]
      %v1384 = vld [vmem:[%s5 + $0x188] sm:$0xf]
      %v1385 = vld [vmem:[%s5 + $0x18c] sm:$0xf]
      %v1386 = vld [vmem:[%s5 + $0x190] sm:$0xf]
      %v1387 = vld [vmem:[%s5 + $0x194] sm:$0xf]
      %v1388 = vld [vmem:[%s5 + $0x198] sm:$0xf]
      %v1389 = vld [vmem:[%s5 + $0x19c] sm:$0xf]
      %v1390 = vld [vmem:[%s5 + $0x1a0] sm:$0xf]
      %v1391 = vld [vmem:[%s5 + $0x1a4] sm:$0xf]
      %v1392 = vld [vmem:[%s5 + $0x1a8] sm:$0xf]
      %v1393 = vld [vmem:[%s5 + $0x1ac] sm:$0xf]
      %v1394 = vld [vmem:[%s5 + $0x1b0] sm:$0xf]
      %v1395 = vld [vmem:[%s5 + $0x1b4] sm:$0xf]
      %v1396 = vld [vmem:[%s5 + $0x1b8] sm:$0xf]
      %v1397 = vld [vmem:[%s5 + $0x1bc] sm:$0xf]
      %v1398 = vld [vmem:[%s5 + $0x1c0] sm:$0xf]
      %v1399 = vld [vmem:[%s5 + $0x1c4] sm:$0xf]
      %v1400 = vld [vmem:[%s5 + $0x1c8] sm:$0xf]
      %v1401 = vld [vmem:[%s5 + $0x1cc] sm:$0xf]
      %v1402 = vld [vmem:[%s5 + $0x1d0] sm:$0xf]
      %v1403 = vld [vmem:[%s5 + $0x1d4] sm:$0xf]
      %v1404 = vld [vmem:[%s5 + $0x1d8] sm:$0xf]
      %v1405 = vld [vmem:[%s5 + $0x1dc] sm:$0xf]
      %v1406 = vld [vmem:[%s5 + $0x1e0] sm:$0xf]
      %v1407 = vld [vmem:[%s5 + $0x1e4] sm:$0xf]
      %v1408 = vld [vmem:[%s5 + $0x1e8] sm:$0xf]
      %v1409 = vld [vmem:[%s5 + $0x1ec] sm:$0xf]
      %v1410 = vld [vmem:[%s5 + $0x1f0] sm:$0xf]
      %v1411 = vld [vmem:[%s5 + $0x1f4] sm:$0xf]
      %v1412 = vld [vmem:[%s5 + $0x1f8] sm:$0xf]
      %v1413 = vld [vmem:[%s5 + $0x1fc] sm:$0xf]
      %v1414 = vld [vmem:[%s6] sm:$0x1]
      %v1416 = vlaneseq
      %v1417 = vshrl.u32 %v1416, 7
      %v1418 = vsub.s32 0, %v1417
      %v1419 = vrot.slane %v1414, %v1418
      %v1549 = vunpack.c.l.b16 %v1286
      %v1550 = vunpack.c.l.b16 %v1287
      %v1551 = vunpack.c.l.b16 %v1288
      %v1552 = vunpack.c.l.b16 %v1289
      %v1553 = vunpack.c.l.b16 %v1290
      %v1554 = vunpack.c.l.b16 %v1291
      %v1555 = vunpack.c.l.b16 %v1292
      %v1556 = vunpack.c.l.b16 %v1293
      %v1557 = vunpack.c.l.b16 %v1294
      %v1558 = vunpack.c.l.b16 %v1295
      %v1559 = vunpack.c.l.b16 %v1296
      %v1560 = vunpack.c.l.b16 %v1297
      %v1561 = vunpack.c.l.b16 %v1298
      %v1562 = vunpack.c.l.b16 %v1299
      %v1563 = vunpack.c.l.b16 %v1300
      %v1564 = vunpack.c.l.b16 %v1301
      %v1565 = vunpack.c.l.b16 %v1302
      %v1566 = vunpack.c.l.b16 %v1303
      %v1567 = vunpack.c.l.b16 %v1304
      %v1568 = vunpack.c.l.b16 %v1305
      %v1569 = vunpack.c.l.b16 %v1306
      %v1570 = vunpack.c.l.b16 %v1307
      %v1571 = vunpack.c.l.b16 %v1308
      %v1572 = vunpack.c.l.b16 %v1309
      %v1573 = vunpack.c.l.b16 %v1310
      %v1574 = vunpack.c.l.b16 %v1311
      %v1575 = vunpack.c.l.b16 %v1312
      %v1576 = vunpack.c.l.b16 %v1313
      %v1577 = vunpack.c.l.b16 %v1314
      %v1578 = vunpack.c.l.b16 %v1315
      %v1579 = vunpack.c.l.b16 %v1316
      %v1580 = vunpack.c.l.b16 %v1317
      %v1581 = vunpack.c.l.b16 %v1318
      %v1582 = vunpack.c.l.b16 %v1319
      %v1583 = vunpack.c.l.b16 %v1320
      %v1584 = vunpack.c.l.b16 %v1321
      %v1585 = vunpack.c.l.b16 %v1322
      %v1586 = vunpack.c.l.b16 %v1323
      %v1587 = vunpack.c.l.b16 %v1324
      %v1588 = vunpack.c.l.b16 %v1325
      %v1589 = vunpack.c.l.b16 %v1326
      %v1590 = vunpack.c.l.b16 %v1327
      %v1591 = vunpack.c.l.b16 %v1328
      %v1592 = vunpack.c.l.b16 %v1329
      %v1593 = vunpack.c.l.b16 %v1330
      %v1594 = vunpack.c.l.b16 %v1331
      %v1595 = vunpack.c.l.b16 %v1332
      %v1596 = vunpack.c.l.b16 %v1333
      %v1597 = vunpack.c.l.b16 %v1334
      %v1598 = vunpack.c.l.b16 %v1335
      %v1599 = vunpack.c.l.b16 %v1336
      %v1600 = vunpack.c.l.b16 %v1337
      %v1601 = vunpack.c.l.b16 %v1338
      %v1602 = vunpack.c.l.b16 %v1339
      %v1603 = vunpack.c.l.b16 %v1340
      %v1604 = vunpack.c.l.b16 %v1341
      %v1605 = vunpack.c.l.b16 %v1342
      %v1606 = vunpack.c.l.b16 %v1343
      %v1607 = vunpack.c.l.b16 %v1344
      %v1608 = vunpack.c.l.b16 %v1345
      %v1609 = vunpack.c.l.b16 %v1346
      %v1610 = vunpack.c.l.b16 %v1347
      %v1611 = vunpack.c.l.b16 %v1348
      %v1612 = vunpack.c.l.b16 %v1349
      %v1613 = vunpack.c.l.b16 %v1350
      %v1614 = vunpack.c.l.b16 %v1351
      %v1615 = vunpack.c.l.b16 %v1352
      %v1616 = vunpack.c.l.b16 %v1353
      %v1617 = vunpack.c.l.b16 %v1354
      %v1618 = vunpack.c.l.b16 %v1355
      %v1619 = vunpack.c.l.b16 %v1356
      %v1620 = vunpack.c.l.b16 %v1357
      %v1621 = vunpack.c.l.b16 %v1358
      %v1622 = vunpack.c.l.b16 %v1359
      %v1623 = vunpack.c.l.b16 %v1360
      %v1624 = vunpack.c.l.b16 %v1361
      %v1625 = vunpack.c.l.b16 %v1362
      %v1626 = vunpack.c.l.b16 %v1363
      %v1627 = vunpack.c.l.b16 %v1364
      %v1628 = vunpack.c.l.b16 %v1365
      %v1629 = vunpack.c.l.b16 %v1366
      %v1630 = vunpack.c.l.b16 %v1367
      %v1631 = vunpack.c.l.b16 %v1368
      %v1632 = vunpack.c.l.b16 %v1369
      %v1633 = vunpack.c.l.b16 %v1370
      %v1634 = vunpack.c.l.b16 %v1371
      %v1635 = vunpack.c.l.b16 %v1372
      %v1636 = vunpack.c.l.b16 %v1373
      %v1637 = vunpack.c.l.b16 %v1374
      %v1638 = vunpack.c.l.b16 %v1375
      %v1639 = vunpack.c.l.b16 %v1376
      %v1640 = vunpack.c.l.b16 %v1377
      %v1641 = vunpack.c.l.b16 %v1378
      %v1642 = vunpack.c.l.b16 %v1379
      %v1643 = vunpack.c.l.b16 %v1380
      %v1644 = vunpack.c.l.b16 %v1381
      %v1645 = vunpack.c.l.b16 %v1382
      %v1646 = vunpack.c.l.b16 %v1383
      %v1647 = vunpack.c.l.b16 %v1384
      %v1648 = vunpack.c.l.b16 %v1385
      %v1649 = vunpack.c.l.b16 %v1386
      %v1650 = vunpack.c.l.b16 %v1387
      %v1651 = vunpack.c.l.b16 %v1388
      %v1652 = vunpack.c.l.b16 %v1389
      %v1653 = vunpack.c.l.b16 %v1390
      %v1654 = vunpack.c.l.b16 %v1391
      %v1655 = vunpack.c.l.b16 %v1392
      %v1656 = vunpack.c.l.b16 %v1393
      %v1657 = vunpack.c.l.b16 %v1394
      %v1658 = vunpack.c.l.b16 %v1395
      %v1659 = vunpack.c.l.b16 %v1396
      %v1660 = vunpack.c.l.b16 %v1397
      %v1661 = vunpack.c.l.b16 %v1398
      %v1662 = vunpack.c.l.b16 %v1399
      %v1663 = vunpack.c.l.b16 %v1400
      %v1664 = vunpack.c.l.b16 %v1401
      %v1665 = vunpack.c.l.b16 %v1402
      %v1666 = vunpack.c.l.b16 %v1403
      %v1667 = vunpack.c.l.b16 %v1404
      %v1668 = vunpack.c.l.b16 %v1405
      %v1669 = vunpack.c.l.b16 %v1406
      %v1670 = vunpack.c.l.b16 %v1407
      %v1671 = vunpack.c.l.b16 %v1408
      %v1672 = vunpack.c.l.b16 %v1409
      %v1673 = vunpack.c.l.b16 %v1410
      %v1674 = vunpack.c.l.b16 %v1411
      %v1675 = vunpack.c.l.b16 %v1412
      %v1676 = vunpack.c.l.b16 %v1413
      %v1677 = vpack.c.b16 %v1550, %v1549
      %v1678 = vpack.c.b16 %v1552, %v1551
      %v1679 = vpack.c.b16 %v1554, %v1553
      %v1680 = vpack.c.b16 %v1556, %v1555
      %v1681 = vpack.c.b16 %v1558, %v1557
      %v1682 = vpack.c.b16 %v1560, %v1559
      %v1683 = vpack.c.b16 %v1562, %v1561
      %v1684 = vpack.c.b16 %v1564, %v1563
      %v1685 = vpack.c.b16 %v1566, %v1565
      %v1686 = vpack.c.b16 %v1568, %v1567
      %v1687 = vpack.c.b16 %v1570, %v1569
      %v1688 = vpack.c.b16 %v1572, %v1571
      %v1689 = vpack.c.b16 %v1574, %v1573
      %v1690 = vpack.c.b16 %v1576, %v1575
      %v1691 = vpack.c.b16 %v1578, %v1577
      %v1692 = vpack.c.b16 %v1580, %v1579
      %v1693 = vpack.c.b16 %v1582, %v1581
      %v1694 = vpack.c.b16 %v1584, %v1583
      %v1695 = vpack.c.b16 %v1586, %v1585
      %v1696 = vpack.c.b16 %v1588, %v1587
      %v1697 = vpack.c.b16 %v1590, %v1589
      %v1698 = vpack.c.b16 %v1592, %v1591
      %v1699 = vpack.c.b16 %v1594, %v1593
      %v1700 = vpack.c.b16 %v1596, %v1595
      %v1701 = vpack.c.b16 %v1598, %v1597
      %v1702 = vpack.c.b16 %v1600, %v1599
      %v1703 = vpack.c.b16 %v1602, %v1601
      %v1704 = vpack.c.b16 %v1604, %v1603
      %v1705 = vpack.c.b16 %v1606, %v1605
      %v1706 = vpack.c.b16 %v1608, %v1607
      %v1707 = vpack.c.b16 %v1610, %v1609
      %v1708 = vpack.c.b16 %v1612, %v1611
      %v1709 = vpack.c.b16 %v1614, %v1613
      %v1710 = vpack.c.b16 %v1616, %v1615
      %v1711 = vpack.c.b16 %v1618, %v1617
      %v1712 = vpack.c.b16 %v1620, %v1619
      %v1713 = vpack.c.b16 %v1622, %v1621
      %v1714 = vpack.c.b16 %v1624, %v1623
      %v1715 = vpack.c.b16 %v1626, %v1625
      %v1716 = vpack.c.b16 %v1628, %v1627
      %v1717 = vpack.c.b16 %v1630, %v1629
      %v1718 = vpack.c.b16 %v1632, %v1631
      %v1719 = vpack.c.b16 %v1634, %v1633
      %v1720 = vpack.c.b16 %v1636, %v1635
      %v1721 = vpack.c.b16 %v1638, %v1637
      %v1722 = vpack.c.b16 %v1640, %v1639
      %v1723 = vpack.c.b16 %v1642, %v1641
      %v1724 = vpack.c.b16 %v1644, %v1643
      %v1725 = vpack.c.b16 %v1646, %v1645
      %v1726 = vpack.c.b16 %v1648, %v1647
      %v1727 = vpack.c.b16 %v1650, %v1649
      %v1728 = vpack.c.b16 %v1652, %v1651
      %v1729 = vpack.c.b16 %v1654, %v1653
      %v1730 = vpack.c.b16 %v1656, %v1655
      %v1731 = vpack.c.b16 %v1658, %v1657
      %v1732 = vpack.c.b16 %v1660, %v1659
      %v1733 = vpack.c.b16 %v1662, %v1661
      %v1734 = vpack.c.b16 %v1664, %v1663
      %v1735 = vpack.c.b16 %v1666, %v1665
      %v1736 = vpack.c.b16 %v1668, %v1667
      %v1737 = vpack.c.b16 %v1670, %v1669
      %v1738 = vpack.c.b16 %v1672, %v1671
      %v1739 = vpack.c.b16 %v1674, %v1673
      %v1740 = vpack.c.b16 %v1676, %v1675
      %1805 = vmatprep.subr.bf16.mxu0 0
      %1806 = vmatpush1.bf16.msra.mxu0 %v1684
      %1807 = vmatprep.subr.bf16.mxu0 0
      %1808 = vmatpush1.bf16.msra.mxu0 %v1683
      %1809 = vmatprep.subr.bf16.mxu0 0
      %1810 = vmatpush1.bf16.msra.mxu0 %v1682
      %1811 = vmatprep.subr.bf16.mxu0 0
      %1812 = vmatpush1.bf16.msra.mxu0 %v1681
      %1813 = vmatprep.subr.bf16.mxu0 0
      %1814 = vmatpush1.bf16.msra.mxu0 %v1680
      %1815 = vmatprep.subr.bf16.mxu0 0
      %1816 = vmatpush1.bf16.msra.mxu0 %v1679
      %1817 = vmatprep.subr.bf16.mxu0 0
      %1818 = vmatpush1.bf16.msra.mxu0 %v1678
      %1819 = vmatprep.subr.bf16.mxu0 0
      %1820 = vmatpush1.bf16.msra.mxu0 %v1677
      %1821 = vmatprep.subr.bf16.mxu0 0
      %1822 = vmatpush2.bf16.msra.mxu0 %v1692
      %1823 = vmatprep.subr.bf16.mxu0 0
      %1824 = vmatpush2.bf16.msra.mxu0 %v1691
      %1825 = vmatprep.subr.bf16.mxu0 0
      %1826 = vmatpush2.bf16.msra.mxu0 %v1690
      %1827 = vmatprep.subr.bf16.mxu0 0
      %1828 = vmatpush2.bf16.msra.mxu0 %v1689
      %1829 = vmatprep.subr.bf16.mxu0 0
      %1830 = vmatpush2.bf16.msra.mxu0 %v1688
      %1831 = vmatprep.subr.bf16.mxu0 0
      %1832 = vmatpush2.bf16.msra.mxu0 %v1687
      %1833 = vmatprep.subr.bf16.mxu0 0
      %1834 = vmatpush2.bf16.msra.mxu0 %v1686
      %1835 = vmatprep.subr.bf16.mxu0 0
      %1836 = vmatpush2.bf16.msra.mxu0 %v1685
      %1837 = vmatprep.mubr.bf16.mxu0 %v1141
      %1838 = vmatmul.mubr.bf16.gmra.mxu0 %v1140
      %v1839 = vpop.f32.mrf.mxu0
      %v1840 = vadd.f32 %v1419, %v1839
      %v1841 = vpop.f32.mrf.mxu0
      %v1842 = vpop.f32.mrf.mxu0
      %v1843 = vpop.f32.mrf.mxu0
      %1844 = vdwg.mxu0
      %1845 = vmatprep.subr.bf16.mxu0 0
      %1846 = vmatpush1.bf16.msra.mxu0 %v1700
      %1847 = vmatprep.subr.bf16.mxu0 0
      %1848 = vmatpush1.bf16.msra.mxu0 %v1699
      %1849 = vmatprep.subr.bf16.mxu0 0
      %1850 = vmatpush1.bf16.msra.mxu0 %v1698
      %1851 = vmatprep.subr.bf16.mxu0 0
      %1852 = vmatpush1.bf16.msra.mxu0 %v1697
      %1853 = vmatprep.subr.bf16.mxu0 0
      %1854 = vmatpush1.bf16.msra.mxu0 %v1696
      %1855 = vmatprep.subr.bf16.mxu0 0
      %1856 = vmatpush1.bf16.msra.mxu0 %v1695
      %1857 = vmatprep.subr.bf16.mxu0 0
      %1858 = vmatpush1.bf16.msra.mxu0 %v1694
      %1859 = vmatprep.subr.bf16.mxu0 0
      %1860 = vmatpush1.bf16.msra.mxu0 %v1693
      %1861 = vmatprep.subr.bf16.mxu0 0
      %1862 = vmatpush2.bf16.msra.mxu0 %v1708
      %1863 = vmatprep.subr.bf16.mxu0 0
      %1864 = vmatpush2.bf16.msra.mxu0 %v1707
      %1865 = vmatprep.subr.bf16.mxu0 0
      %1866 = vmatpush2.bf16.msra.mxu0 %v1706
      %1867 = vmatprep.subr.bf16.mxu0 0
      %1868 = vmatpush2.bf16.msra.mxu0 %v1705
      %1869 = vmatprep.subr.bf16.mxu0 0
      %1870 = vmatpush2.bf16.msra.mxu0 %v1704
      %1871 = vmatprep.subr.bf16.mxu0 0
      %1872 = vmatpush2.bf16.msra.mxu0 %v1703
      %1873 = vmatprep.subr.bf16.mxu0 0
      %1874 = vmatpush2.bf16.msra.mxu0 %v1702
      %1875 = vmatprep.subr.bf16.mxu0 0
      %1876 = vmatpush2.bf16.msra.mxu0 %v1701
      %1877 = vmatprep.mubr.bf16.mxu0 %v1189
      %1878 = vmatmul.mubr.bf16.gmra.mxu0 %v1188
      %v1879 = vpop.f32.mrf.mxu0
      %v1880 = vadd.f32 %v1840, %v1879
      %v1881 = vpop.f32.mrf.mxu0
      %v1882 = vpop.f32.mrf.mxu0
      %v1883 = vpop.f32.mrf.mxu0
      %1884 = vdwg.mxu0
      %1885 = vmatprep.subr.bf16.mxu0 0
      %1886 = vmatpush1.bf16.msra.mxu0 %v1716
      %1887 = vmatprep.subr.bf16.mxu0 0
      %1888 = vmatpush1.bf16.msra.mxu0 %v1715
      %1889 = vmatprep.subr.bf16.mxu0 0
      %1890 = vmatpush1.bf16.msra.mxu0 %v1714
      %1891 = vmatprep.subr.bf16.mxu0 0
      %1892 = vmatpush1.bf16.msra.mxu0 %v1713
      %1893 = vmatprep.subr.bf16.mxu0 0
      %1894 = vmatpush1.bf16.msra.mxu0 %v1712
      %1895 = vmatprep.subr.bf16.mxu0 0
      %1896 = vmatpush1.bf16.msra.mxu0 %v1711
      %1897 = vmatprep.subr.bf16.mxu0 0
      %1898 = vmatpush1.bf16.msra.mxu0 %v1710
      %1899 = vmatprep.subr.bf16.mxu0 0
      %1900 = vmatpush1.bf16.msra.mxu0 %v1709
      %1901 = vmatprep.subr.bf16.mxu0 0
      %1902 = vmatpush2.bf16.msra.mxu0 %v1724
      %1903 = vmatprep.subr.bf16.mxu0 0
      %1904 = vmatpush2.bf16.msra.mxu0 %v1723
      %1905 = vmatprep.subr.bf16.mxu0 0
      %1906 = vmatpush2.bf16.msra.mxu0 %v1722
      %1907 = vmatprep.subr.bf16.mxu0 0
      %1908 = vmatpush2.bf16.msra.mxu0 %v1721
      %1909 = vmatprep.subr.bf16.mxu0 0
      %1910 = vmatpush2.bf16.msra.mxu0 %v1720
      %1911 = vmatprep.subr.bf16.mxu0 0
      %1912 = vmatpush2.bf16.msra.mxu0 %v1719
      %1913 = vmatprep.subr.bf16.mxu0 0
      %1914 = vmatpush2.bf16.msra.mxu0 %v1718
      %1915 = vmatprep.subr.bf16.mxu0 0
      %1916 = vmatpush2.bf16.msra.mxu0 %v1717
      %1917 = vmatprep.mubr.bf16.mxu0 %v1237
      %1918 = vmatmul.mubr.bf16.gmra.mxu0 %v1236
      %v1919 = vpop.f32.mrf.mxu0
      %v1920 = vadd.f32 %v1880, %v1919
      %v1921 = vpop.f32.mrf.mxu0
      %v1922 = vpop.f32.mrf.mxu0
      %v1923 = vpop.f32.mrf.mxu0
      %1924 = vdwg.mxu0
      %1925 = vmatprep.subr.bf16.mxu0 0
      %1926 = vmatpush1.bf16.msra.mxu0 %v1732
      %1927 = vmatprep.subr.bf16.mxu0 0
      %1928 = vmatpush1.bf16.msra.mxu0 %v1731
      %1929 = vmatprep.subr.bf16.mxu0 0
      %1930 = vmatpush1.bf16.msra.mxu0 %v1730
      %1931 = vmatprep.subr.bf16.mxu0 0
      %1932 = vmatpush1.bf16.msra.mxu0 %v1729
      %1933 = vmatprep.subr.bf16.mxu0 0
      %1934 = vmatpush1.bf16.msra.mxu0 %v1728
      %1935 = vmatprep.subr.bf16.mxu0 0
      %1936 = vmatpush1.bf16.msra.mxu0 %v1727
      %1937 = vmatprep.subr.bf16.mxu0 0
      %1938 = vmatpush1.bf16.msra.mxu0 %v1726
      %1939 = vmatprep.subr.bf16.mxu0 0
      %1940 = vmatpush1.bf16.msra.mxu0 %v1725
      %1941 = vmatprep.subr.bf16.mxu0 0
      %1942 = vmatpush2.bf16.msra.mxu0 %v1740
      %1943 = vmatprep.subr.bf16.mxu0 0
      %1944 = vmatpush2.bf16.msra.mxu0 %v1739
      %1945 = vmatprep.subr.bf16.mxu0 0
      %1946 = vmatpush2.bf16.msra.mxu0 %v1738
      %1947 = vmatprep.subr.bf16.mxu0 0
      %1948 = vmatpush2.bf16.msra.mxu0 %v1737
      %1949 = vmatprep.subr.bf16.mxu0 0
      %1950 = vmatpush2.bf16.msra.mxu0 %v1736
      %1951 = vmatprep.subr.bf16.mxu0 0
      %1952 = vmatpush2.bf16.msra.mxu0 %v1735
      %1953 = vmatprep.subr.bf16.mxu0 0
      %1954 = vmatpush2.bf16.msra.mxu0 %v1734
      %1955 = vmatprep.subr.bf16.mxu0 0
      %1956 = vmatpush2.bf16.msra.mxu0 %v1733
      %1957 = vmatprep.mubr.bf16.mxu0 %v1285
      %1958 = vmatmul.mubr.bf16.gmra.mxu0 %v1284
      %v1959 = vpop.f32.mrf.mxu0
      %v1960 = vadd.f32 %v1920, %v1959
      %v1961 = vpop.f32.mrf.mxu0
      %v1962 = vpop.f32.mrf.mxu0
      %v1963 = vpop.f32.mrf.mxu0
      %1964 = vdwg.mxu0
      %v1965 = vmax.f32 %v1960, 0.0
      %v1966 = vpack.c.bf16 %v1965, %v1965
      %v1967 = vld [vmem:[%s7] sm:$0x1]
      %vm1968 = vcmask 31744
      %v1970 = vsel %vm1968, %v1967, 0
      %vm1972 = vcmask 1041408
      %v1974 = vsel %vm1972, %v1966, 0
      %1976 = vmatprep.subr.bf16.mxu0 0
      %1977 = vmatpush1.bf16.msra.mxu0 0
      %1978 = vmatprep.subr.bf16.mxu0 0
      %1979 = vmatpush1.bf16.msra.mxu0 0
      %1980 = vmatprep.subr.bf16.mxu0 0
      %1981 = vmatpush1.bf16.msra.mxu0 0
      %1982 = vmatprep.subr.bf16.mxu0 0
      %1983 = vmatpush1.bf16.msra.mxu0 0
      %1984 = vmatprep.subr.bf16.mxu0 0
      %1985 = vmatpush1.bf16.msra.mxu0 0
      %1986 = vmatprep.subr.bf16.mxu0 0
      %1987 = vmatpush1.bf16.msra.mxu0 0
      %1988 = vmatprep.subr.bf16.mxu0 0
      %1989 = vmatpush1.bf16.msra.mxu0 0
      %1990 = vmatprep.subr.bf16.mxu0 0
      %1991 = vmatpush1.bf16.msra.mxu0 %v1974
      %1992 = vmatprep.subr.bf16.mxu0 0
      %1993 = vmatpush2.bf16.msra.mxu0 0
      %1994 = vmatprep.subr.bf16.mxu0 0
      %1995 = vmatpush2.bf16.msra.mxu0 0
      %1996 = vmatprep.subr.bf16.mxu0 0
      %1997 = vmatpush2.bf16.msra.mxu0 0
      %1998 = vmatprep.subr.bf16.mxu0 0
      %1999 = vmatpush2.bf16.msra.mxu0 0
      %2000 = vmatprep.subr.bf16.mxu0 0
      %2001 = vmatpush2.bf16.msra.mxu0 0
      %2002 = vmatprep.subr.bf16.mxu0 0
      %2003 = vmatpush2.bf16.msra.mxu0 0
      %2004 = vmatprep.subr.bf16.mxu0 0
      %2005 = vmatpush2.bf16.msra.mxu0 0
      %2006 = vmatprep.subr.bf16.mxu0 0
      %2007 = vmatpush2.bf16.msra.mxu0 0
      %2008 = vmatprep.mubr.bf16.mxu0 0
      %2009 = vmatmul.mubr.bf16.gmra.mxu0 %v1970
      %v2010 = vpop.f32.mrf.mxu0
      %v2011 = vadd.f32 0.0, %v2010
      %v2012 = vpop.f32.mrf.mxu0
      %v2013 = vpop.f32.mrf.mxu0
      %v2014 = vpop.f32.mrf.mxu0
      %2015 = vdwg.mxu0
      %v2016 = vpack.c.bf16 %v2011, %v2011
      %s2017 = scalar_lea.vmem %s7, 1
      %v2018 = vld [vmem:[%s2017] sm:$0x1]
      %v2020 = vsel %vm1968, %v2018, 0
      %2022 = vmatprep.subr.bf16.mxu0 0
      %2023 = vmatpush1.bf16.msra.mxu0 0
      %2024 = vmatprep.subr.bf16.mxu0 0
      %2025 = vmatpush1.bf16.msra.mxu0 0
      %2026 = vmatprep.subr.bf16.mxu0 0
      %2027 = vmatpush1.bf16.msra.mxu0 0
      %2028 = vmatprep.subr.bf16.mxu0 0
      %2029 = vmatpush1.bf16.msra.mxu0 0
      %2030 = vmatprep.subr.bf16.mxu0 0
      %2031 = vmatpush1.bf16.msra.mxu0 0
      %2032 = vmatprep.subr.bf16.mxu0 0
      %2033 = vmatpush1.bf16.msra.mxu0 0
      %2034 = vmatprep.subr.bf16.mxu0 0
      %2035 = vmatpush1.bf16.msra.mxu0 0
      %2036 = vmatprep.subr.bf16.mxu0 0
      %2037 = vmatpush1.bf16.msra.mxu0 %v1974
      %2038 = vmatprep.subr.bf16.mxu0 0
      %2039 = vmatpush2.bf16.msra.mxu0 0
      %2040 = vmatprep.subr.bf16.mxu0 0
      %2041 = vmatpush2.bf16.msra.mxu0 0
      %2042 = vmatprep.subr.bf16.mxu0 0
      %2043 = vmatpush2.bf16.msra.mxu0 0
      %2044 = vmatprep.subr.bf16.mxu0 0
      %2045 = vmatpush2.bf16.msra.mxu0 0
      %2046 = vmatprep.subr.bf16.mxu0 0
      %2047 = vmatpush2.bf16.msra.mxu0 0
      %2048 = vmatprep.subr.bf16.mxu0 0
      %2049 = vmatpush2.bf16.msra.mxu0 0
      %2050 = vmatprep.subr.bf16.mxu0 0
      %2051 = vmatpush2.bf16.msra.mxu0 0
      %2052 = vmatprep.subr.bf16.mxu0 0
      %2053 = vmatpush2.bf16.msra.mxu0 0
      %2054 = vmatprep.mubr.bf16.mxu0 0
      %2055 = vmatmul.mubr.bf16.gmra.mxu0 %v2020
      %v2056 = vpop.f32.mrf.mxu0
      %v2057 = vadd.f32 0.0, %v2056
      %v2058 = vpop.f32.mrf.mxu0
      %v2059 = vpop.f32.mrf.mxu0
      %v2060 = vpop.f32.mrf.mxu0
      %2061 = vdwg.mxu0
      %v2062 = vpack.c.bf16 %v2057, %v2057
      %s2063 = scalar_lea.vmem %s7, 2
      %v2064 = vld [vmem:[%s2063] sm:$0x1]
      %v2066 = vsel %vm1968, %v2064, 0
      %2068 = vmatprep.subr.bf16.mxu0 0
      %2069 = vmatpush1.bf16.msra.mxu0 0
      %2070 = vmatprep.subr.bf16.mxu0 0
      %2071 = vmatpush1.bf16.msra.mxu0 0
      %2072 = vmatprep.subr.bf16.mxu0 0
      %2073 = vmatpush1.bf16.msra.mxu0 0
      %2074 = vmatprep.subr.bf16.mxu0 0
      %2075 = vmatpush1.bf16.msra.mxu0 0
      %2076 = vmatprep.subr.bf16.mxu0 0
      %2077 = vmatpush1.bf16.msra.mxu0 0
      %2078 = vmatprep.subr.bf16.mxu0 0
      %2079 = vmatpush1.bf16.msra.mxu0 0
      %2080 = vmatprep.subr.bf16.mxu0 0
      %2081 = vmatpush1.bf16.msra.mxu0 0
      %2082 = vmatprep.subr.bf16.mxu0 0
      %2083 = vmatpush1.bf16.msra.mxu0 %v1974
      %2084 = vmatprep.subr.bf16.mxu0 0
      %2085 = vmatpush2.bf16.msra.mxu0 0
      %2086 = vmatprep.subr.bf16.mxu0 0
      %2087 = vmatpush2.bf16.msra.mxu0 0
      %2088 = vmatprep.subr.bf16.mxu0 0
      %2089 = vmatpush2.bf16.msra.mxu0 0
      %2090 = vmatprep.subr.bf16.mxu0 0
      %2091 = vmatpush2.bf16.msra.mxu0 0
      %2092 = vmatprep.subr.bf16.mxu0 0
      %2093 = vmatpush2.bf16.msra.mxu0 0
      %2094 = vmatprep.subr.bf16.mxu0 0
      %2095 = vmatpush2.bf16.msra.mxu0 0
      %2096 = vmatprep.subr.bf16.mxu0 0
      %2097 = vmatpush2.bf16.msra.mxu0 0
      %2098 = vmatprep.subr.bf16.mxu0 0
      %2099 = vmatpush2.bf16.msra.mxu0 0
      %2100 = vmatprep.mubr.bf16.mxu0 0
      %2101 = vmatmul.mubr.bf16.gmra.mxu0 %v2066
      %v2102 = vpop.f32.mrf.mxu0
      %v2103 = vadd.f32 0.0, %v2102
      %v2104 = vpop.f32.mrf.mxu0
      %v2105 = vpop.f32.mrf.mxu0
      %v2106 = vpop.f32.mrf.mxu0
      %2107 = vdwg.mxu0
      %v2108 = vpack.c.bf16 %v2103, %v2103
      %s2109 = scalar_lea.vmem %s7, 3
      %v2110 = vld [vmem:[%s2109] sm:$0x1]
      %v2112 = vsel %vm1968, %v2110, 0
      %2114 = vmatprep.subr.bf16.mxu0 0
      %2115 = vmatpush1.bf16.msra.mxu0 0
      %2116 = vmatprep.subr.bf16.mxu0 0
      %2117 = vmatpush1.bf16.msra.mxu0 0
      %2118 = vmatprep.subr.bf16.mxu0 0
      %2119 = vmatpush1.bf16.msra.mxu0 0
      %2120 = vmatprep.subr.bf16.mxu0 0
      %2121 = vmatpush1.bf16.msra.mxu0 0
      %2122 = vmatprep.subr.bf16.mxu0 0
      %2123 = vmatpush1.bf16.msra.mxu0 0
      %2124 = vmatprep.subr.bf16.mxu0 0
      %2125 = vmatpush1.bf16.msra.mxu0 0
      %2126 = vmatprep.subr.bf16.mxu0 0
      %2127 = vmatpush1.bf16.msra.mxu0 0
      %2128 = vmatprep.subr.bf16.mxu0 0
      %2129 = vmatpush1.bf16.msra.mxu0 %v1974
      %2130 = vmatprep.subr.bf16.mxu0 0
      %2131 = vmatpush2.bf16.msra.mxu0 0
      %2132 = vmatprep.subr.bf16.mxu0 0
      %2133 = vmatpush2.bf16.msra.mxu0 0
      %2134 = vmatprep.subr.bf16.mxu0 0
      %2135 = vmatpush2.bf16.msra.mxu0 0
      %2136 = vmatprep.subr.bf16.mxu0 0
      %2137 = vmatpush2.bf16.msra.mxu0 0
      %2138 = vmatprep.subr.bf16.mxu0 0
      %2139 = vmatpush2.bf16.msra.mxu0 0
      %2140 = vmatprep.subr.bf16.mxu0 0
      %2141 = vmatpush2.bf16.msra.mxu0 0
      %2142 = vmatprep.subr.bf16.mxu0 0
      %2143 = vmatpush2.bf16.msra.mxu0 0
      %2144 = vmatprep.subr.bf16.mxu0 0
      %2145 = vmatpush2.bf16.msra.mxu0 0
      %2146 = vmatprep.mubr.bf16.mxu0 0
      %2147 = vmatmul.mubr.bf16.gmra.mxu0 %v2112
      %v2148 = vpop.f32.mrf.mxu0
      %v2149 = vadd.f32 0.0, %v2148
      %v2150 = vpop.f32.mrf.mxu0
      %v2151 = vpop.f32.mrf.mxu0
      %v2152 = vpop.f32.mrf.mxu0
      %2153 = vdwg.mxu0
      %v2154 = vpack.c.bf16 %v2149, %v2149
      %v2155 = vld [vmem:[%s8] sm:$0xf]
      %v2156 = vld [vmem:[%s8 + $0x4] sm:$0xf]
      %v2157 = vld [vmem:[%s8 + $0x8] sm:$0xf]
      %v2158 = vld [vmem:[%s8 + $0xc] sm:$0xf]
      %v2159 = vld [vmem:[%s8 + $0x10] sm:$0xf]
      %v2160 = vld [vmem:[%s8 + $0x14] sm:$0xf]
      %v2161 = vld [vmem:[%s8 + $0x18] sm:$0xf]
      %v2162 = vld [vmem:[%s8 + $0x1c] sm:$0xf]
      %v2163 = vld [vmem:[%s8 + $0x20] sm:$0xf]
      %v2164 = vld [vmem:[%s8 + $0x24] sm:$0xf]
      %v2165 = vld [vmem:[%s8 + $0x28] sm:$0xf]
      %v2166 = vld [vmem:[%s8 + $0x2c] sm:$0xf]
      %v2167 = vld [vmem:[%s8 + $0x30] sm:$0xf]
      %v2168 = vld [vmem:[%s8 + $0x34] sm:$0xf]
      %v2169 = vld [vmem:[%s8 + $0x38] sm:$0xf]
      %v2170 = vld [vmem:[%s8 + $0x3c] sm:$0xf]
      %v2171 = vld [vmem:[%s8 + $0x40] sm:$0xf]
      %v2172 = vld [vmem:[%s8 + $0x44] sm:$0xf]
      %v2173 = vld [vmem:[%s8 + $0x48] sm:$0xf]
      %v2174 = vld [vmem:[%s8 + $0x4c] sm:$0xf]
      %v2175 = vld [vmem:[%s8 + $0x50] sm:$0xf]
      %v2176 = vld [vmem:[%s8 + $0x54] sm:$0xf]
      %v2177 = vld [vmem:[%s8 + $0x58] sm:$0xf]
      %v2178 = vld [vmem:[%s8 + $0x5c] sm:$0xf]
      %v2179 = vld [vmem:[%s8 + $0x60] sm:$0xf]
      %v2180 = vld [vmem:[%s8 + $0x64] sm:$0xf]
      %v2181 = vld [vmem:[%s8 + $0x68] sm:$0xf]
      %v2182 = vld [vmem:[%s8 + $0x6c] sm:$0xf]
      %v2183 = vld [vmem:[%s8 + $0x70] sm:$0xf]
      %v2184 = vld [vmem:[%s8 + $0x74] sm:$0xf]
      %v2185 = vld [vmem:[%s8 + $0x78] sm:$0xf]
      %v2186 = vld [vmem:[%s8 + $0x7c] sm:$0xf]
      %v2187 = vld [vmem:[%s8 + $0x80] sm:$0xf]
      %v2188 = vld [vmem:[%s8 + $0x84] sm:$0xf]
      %v2189 = vld [vmem:[%s8 + $0x88] sm:$0xf]
      %v2190 = vld [vmem:[%s8 + $0x8c] sm:$0xf]
      %v2191 = vld [vmem:[%s8 + $0x90] sm:$0xf]
      %v2192 = vld [vmem:[%s8 + $0x94] sm:$0xf]
      %v2193 = vld [vmem:[%s8 + $0x98] sm:$0xf]
      %v2194 = vld [vmem:[%s8 + $0x9c] sm:$0xf]
      %v2195 = vld [vmem:[%s8 + $0xa0] sm:$0xf]
      %v2196 = vld [vmem:[%s8 + $0xa4] sm:$0xf]
      %v2197 = vld [vmem:[%s8 + $0xa8] sm:$0xf]
      %v2198 = vld [vmem:[%s8 + $0xac] sm:$0xf]
      %v2199 = vld [vmem:[%s8 + $0xb0] sm:$0xf]
      %v2200 = vld [vmem:[%s8 + $0xb4] sm:$0xf]
      %v2201 = vld [vmem:[%s8 + $0xb8] sm:$0xf]
      %v2202 = vld [vmem:[%s8 + $0xbc] sm:$0xf]
      %v2203 = vld [vmem:[%s8 + $0xc0] sm:$0xf]
      %v2204 = vld [vmem:[%s8 + $0xc4] sm:$0xf]
      %v2205 = vld [vmem:[%s8 + $0xc8] sm:$0xf]
      %v2206 = vld [vmem:[%s8 + $0xcc] sm:$0xf]
      %v2207 = vld [vmem:[%s8 + $0xd0] sm:$0xf]
      %v2208 = vld [vmem:[%s8 + $0xd4] sm:$0xf]
      %v2209 = vld [vmem:[%s8 + $0xd8] sm:$0xf]
      %v2210 = vld [vmem:[%s8 + $0xdc] sm:$0xf]
      %v2211 = vld [vmem:[%s8 + $0xe0] sm:$0xf]
      %v2212 = vld [vmem:[%s8 + $0xe4] sm:$0xf]
      %v2213 = vld [vmem:[%s8 + $0xe8] sm:$0xf]
      %v2214 = vld [vmem:[%s8 + $0xec] sm:$0xf]
      %v2215 = vld [vmem:[%s8 + $0xf0] sm:$0xf]
      %v2216 = vld [vmem:[%s8 + $0xf4] sm:$0xf]
      %v2217 = vld [vmem:[%s8 + $0xf8] sm:$0xf]
      %v2218 = vld [vmem:[%s8 + $0xfc] sm:$0xf]
      %v2219 = vld [vmem:[%s9] sm:$0x1]
      %v2221 = vlaneseq
      %v2222 = vshrl.u32 %v2221, 7
      %v2223 = vsub.s32 0, %v2222
      %v2224 = vrot.slane %v2219, %v2223
      %v2290 = vunpack.c.l.b16 %v2155
      %v2291 = vunpack.c.l.b16 %v2156
      %v2292 = vunpack.c.l.b16 %v2157
      %v2293 = vunpack.c.l.b16 %v2158
      %v2294 = vunpack.c.l.b16 %v2159
      %v2295 = vunpack.c.l.b16 %v2160
      %v2296 = vunpack.c.l.b16 %v2161
      %v2297 = vunpack.c.l.b16 %v2162
      %v2298 = vunpack.c.l.b16 %v2163
      %v2299 = vunpack.c.l.b16 %v2164
      %v2300 = vunpack.c.l.b16 %v2165
      %v2301 = vunpack.c.l.b16 %v2166
      %v2302 = vunpack.c.l.b16 %v2167
      %v2303 = vunpack.c.l.b16 %v2168
      %v2304 = vunpack.c.l.b16 %v2169
      %v2305 = vunpack.c.l.b16 %v2170
      %v2306 = vunpack.c.l.b16 %v2171
      %v2307 = vunpack.c.l.b16 %v2172
      %v2308 = vunpack.c.l.b16 %v2173
      %v2309 = vunpack.c.l.b16 %v2174
      %v2310 = vunpack.c.l.b16 %v2175
      %v2311 = vunpack.c.l.b16 %v2176
      %v2312 = vunpack.c.l.b16 %v2177
      %v2313 = vunpack.c.l.b16 %v2178
      %v2314 = vunpack.c.l.b16 %v2179
      %v2315 = vunpack.c.l.b16 %v2180
      %v2316 = vunpack.c.l.b16 %v2181
      %v2317 = vunpack.c.l.b16 %v2182
      %v2318 = vunpack.c.l.b16 %v2183
      %v2319 = vunpack.c.l.b16 %v2184
      %v2320 = vunpack.c.l.b16 %v2185
      %v2321 = vunpack.c.l.b16 %v2186
      %v2322 = vunpack.c.l.b16 %v2187
      %v2323 = vunpack.c.l.b16 %v2188
      %v2324 = vunpack.c.l.b16 %v2189
      %v2325 = vunpack.c.l.b16 %v2190
      %v2326 = vunpack.c.l.b16 %v2191
      %v2327 = vunpack.c.l.b16 %v2192
      %v2328 = vunpack.c.l.b16 %v2193
      %v2329 = vunpack.c.l.b16 %v2194
      %v2330 = vunpack.c.l.b16 %v2195
      %v2331 = vunpack.c.l.b16 %v2196
      %v2332 = vunpack.c.l.b16 %v2197
      %v2333 = vunpack.c.l.b16 %v2198
      %v2334 = vunpack.c.l.b16 %v2199
      %v2335 = vunpack.c.l.b16 %v2200
      %v2336 = vunpack.c.l.b16 %v2201
      %v2337 = vunpack.c.l.b16 %v2202
      %v2338 = vunpack.c.l.b16 %v2203
      %v2339 = vunpack.c.l.b16 %v2204
      %v2340 = vunpack.c.l.b16 %v2205
      %v2341 = vunpack.c.l.b16 %v2206
      %v2342 = vunpack.c.l.b16 %v2207
      %v2343 = vunpack.c.l.b16 %v2208
      %v2344 = vunpack.c.l.b16 %v2209
      %v2345 = vunpack.c.l.b16 %v2210
      %v2346 = vunpack.c.l.b16 %v2211
      %v2347 = vunpack.c.l.b16 %v2212
      %v2348 = vunpack.c.l.b16 %v2213
      %v2349 = vunpack.c.l.b16 %v2214
      %v2350 = vunpack.c.l.b16 %v2215
      %v2351 = vunpack.c.l.b16 %v2216
      %v2352 = vunpack.c.l.b16 %v2217
      %v2353 = vunpack.c.l.b16 %v2218
      %v2354 = vpack.c.b16 %v2291, %v2290
      %v2355 = vpack.c.b16 %v2293, %v2292
      %v2356 = vpack.c.b16 %v2295, %v2294
      %v2357 = vpack.c.b16 %v2297, %v2296
      %v2358 = vpack.c.b16 %v2299, %v2298
      %v2359 = vpack.c.b16 %v2301, %v2300
      %v2360 = vpack.c.b16 %v2303, %v2302
      %v2361 = vpack.c.b16 %v2305, %v2304
      %v2362 = vpack.c.b16 %v2307, %v2306
      %v2363 = vpack.c.b16 %v2309, %v2308
      %v2364 = vpack.c.b16 %v2311, %v2310
      %v2365 = vpack.c.b16 %v2313, %v2312
      %v2366 = vpack.c.b16 %v2315, %v2314
      %v2367 = vpack.c.b16 %v2317, %v2316
      %v2368 = vpack.c.b16 %v2319, %v2318
      %v2369 = vpack.c.b16 %v2321, %v2320
      %v2370 = vpack.c.b16 %v2323, %v2322
      %v2371 = vpack.c.b16 %v2325, %v2324
      %v2372 = vpack.c.b16 %v2327, %v2326
      %v2373 = vpack.c.b16 %v2329, %v2328
      %v2374 = vpack.c.b16 %v2331, %v2330
      %v2375 = vpack.c.b16 %v2333, %v2332
      %v2376 = vpack.c.b16 %v2335, %v2334
      %v2377 = vpack.c.b16 %v2337, %v2336
      %v2378 = vpack.c.b16 %v2339, %v2338
      %v2379 = vpack.c.b16 %v2341, %v2340
      %v2380 = vpack.c.b16 %v2343, %v2342
      %v2381 = vpack.c.b16 %v2345, %v2344
      %v2382 = vpack.c.b16 %v2347, %v2346
      %v2383 = vpack.c.b16 %v2349, %v2348
      %v2384 = vpack.c.b16 %v2351, %v2350
      %v2385 = vpack.c.b16 %v2353, %v2352
      %2418 = vmatprep.subr.bf16.mxu0 0
      %2419 = vmatpush1.bf16.msra.mxu0 %v2361
      %2420 = vmatprep.subr.bf16.mxu0 0
      %2421 = vmatpush1.bf16.msra.mxu0 %v2360
      %2422 = vmatprep.subr.bf16.mxu0 0
      %2423 = vmatpush1.bf16.msra.mxu0 %v2359
      %2424 = vmatprep.subr.bf16.mxu0 0
      %2425 = vmatpush1.bf16.msra.mxu0 %v2358
      %2426 = vmatprep.subr.bf16.mxu0 0
      %2427 = vmatpush1.bf16.msra.mxu0 %v2357
      %2428 = vmatprep.subr.bf16.mxu0 0
      %2429 = vmatpush1.bf16.msra.mxu0 %v2356
      %2430 = vmatprep.subr.bf16.mxu0 0
      %2431 = vmatpush1.bf16.msra.mxu0 %v2355
      %2432 = vmatprep.subr.bf16.mxu0 0
      %2433 = vmatpush1.bf16.msra.mxu0 %v2354
      %2434 = vmatprep.subr.bf16.mxu0 0
      %2435 = vmatpush2.bf16.msra.mxu0 %v2369
      %2436 = vmatprep.subr.bf16.mxu0 0
      %2437 = vmatpush2.bf16.msra.mxu0 %v2368
      %2438 = vmatprep.subr.bf16.mxu0 0
      %2439 = vmatpush2.bf16.msra.mxu0 %v2367
      %2440 = vmatprep.subr.bf16.mxu0 0
      %2441 = vmatpush2.bf16.msra.mxu0 %v2366
      %2442 = vmatprep.subr.bf16.mxu0 0
      %2443 = vmatpush2.bf16.msra.mxu0 %v2365
      %2444 = vmatprep.subr.bf16.mxu0 0
      %2445 = vmatpush2.bf16.msra.mxu0 %v2364
      %2446 = vmatprep.subr.bf16.mxu0 0
      %2447 = vmatpush2.bf16.msra.mxu0 %v2363
      %2448 = vmatprep.subr.bf16.mxu0 0
      %2449 = vmatpush2.bf16.msra.mxu0 %v2362
      %2450 = vmatprep.mubr.bf16.mxu0 %v2062
      %2451 = vmatmul.mubr.bf16.gmra.mxu0 %v2016
      %v2452 = vpop.f32.mrf.mxu0
      %v2453 = vadd.f32 %v2224, %v2452
      %v2454 = vpop.f32.mrf.mxu0
      %v2455 = vpop.f32.mrf.mxu0
      %v2456 = vpop.f32.mrf.mxu0
      %2457 = vdwg.mxu0
      %2458 = vmatprep.subr.bf16.mxu0 0
      %2459 = vmatpush1.bf16.msra.mxu0 %v2377
      %2460 = vmatprep.subr.bf16.mxu0 0
      %2461 = vmatpush1.bf16.msra.mxu0 %v2376
      %2462 = vmatprep.subr.bf16.mxu0 0
      %2463 = vmatpush1.bf16.msra.mxu0 %v2375
      %2464 = vmatprep.subr.bf16.mxu0 0
      %2465 = vmatpush1.bf16.msra.mxu0 %v2374
      %2466 = vmatprep.subr.bf16.mxu0 0
      %2467 = vmatpush1.bf16.msra.mxu0 %v2373
      %2468 = vmatprep.subr.bf16.mxu0 0
      %2469 = vmatpush1.bf16.msra.mxu0 %v2372
      %2470 = vmatprep.subr.bf16.mxu0 0
      %2471 = vmatpush1.bf16.msra.mxu0 %v2371
      %2472 = vmatprep.subr.bf16.mxu0 0
      %2473 = vmatpush1.bf16.msra.mxu0 %v2370
      %2474 = vmatprep.subr.bf16.mxu0 0
      %2475 = vmatpush2.bf16.msra.mxu0 %v2385
      %2476 = vmatprep.subr.bf16.mxu0 0
      %2477 = vmatpush2.bf16.msra.mxu0 %v2384
      %2478 = vmatprep.subr.bf16.mxu0 0
      %2479 = vmatpush2.bf16.msra.mxu0 %v2383
      %2480 = vmatprep.subr.bf16.mxu0 0
      %2481 = vmatpush2.bf16.msra.mxu0 %v2382
      %2482 = vmatprep.subr.bf16.mxu0 0
      %2483 = vmatpush2.bf16.msra.mxu0 %v2381
      %2484 = vmatprep.subr.bf16.mxu0 0
      %2485 = vmatpush2.bf16.msra.mxu0 %v2380
      %2486 = vmatprep.subr.bf16.mxu0 0
      %2487 = vmatpush2.bf16.msra.mxu0 %v2379
      %2488 = vmatprep.subr.bf16.mxu0 0
      %2489 = vmatpush2.bf16.msra.mxu0 %v2378
      %2490 = vmatprep.mubr.bf16.mxu0 %v2154
      %2491 = vmatmul.mubr.bf16.gmra.mxu0 %v2108
      %v2492 = vpop.f32.mrf.mxu0
      %v2493 = vadd.f32 %v2453, %v2492
      %v2494 = vpop.f32.mrf.mxu0
      %v2495 = vpop.f32.mrf.mxu0
      %v2496 = vpop.f32.mrf.mxu0
      %2497 = vdwg.mxu0
      %v2498 = vmax.f32 %v2493, 0.0
      %v2499 = vpack.c.bf16 %v2498, %v2498
      %v2500 = vld [vmem:[%s10] sm:$0xf]
      %v2501 = vld [vmem:[%s10 + $0x4] sm:$0xf]
      %v2502 = vld [vmem:[%s10 + $0x8] sm:$0xf]
      %v2503 = vld [vmem:[%s10 + $0xc] sm:$0xf]
      %v2504 = vld [vmem:[%s10 + $0x10] sm:$0xf]
      %v2505 = vld [vmem:[%s10 + $0x14] sm:$0xf]
      %v2506 = vld [vmem:[%s10 + $0x18] sm:$0xf]
      %v2507 = vld [vmem:[%s10 + $0x1c] sm:$0xf]
      %v2508 = vld [vmem:[%s11] sm:$0x1]
      %v2510 = vlaneseq
      %v2511 = vshrl.u32 %v2510, 7
      %v2512 = vsub.s32 0, %v2511
      %v2513 = vrot.slane %v2508, %v2512
      %v2523 = vunpack.c.l.b16 %v2500
      %v2524 = vunpack.c.l.b16 %v2501
      %v2525 = vunpack.c.l.b16 %v2502
      %v2526 = vunpack.c.l.b16 %v2503
      %v2527 = vunpack.c.l.b16 %v2504
      %v2528 = vunpack.c.l.b16 %v2505
      %v2529 = vunpack.c.l.b16 %v2506
      %v2530 = vunpack.c.l.b16 %v2507
      %v2531 = vpack.c.b16 %v2524, %v2523
      %v2532 = vpack.c.b16 %v2526, %v2525
      %v2533 = vpack.c.b16 %v2528, %v2527
      %v2534 = vpack.c.b16 %v2530, %v2529
      %vm2539 = vcmask 523264
      %v2541 = vsel %vm2539, %v2499, 0
      %2543 = vmatprep.subr.bf16.mxu0 0
      %2544 = vmatpush1.bf16.msra.mxu0 0
      %2545 = vmatprep.subr.bf16.mxu0 0
      %2546 = vmatpush1.bf16.msra.mxu0 0
      %2547 = vmatprep.subr.bf16.mxu0 0
      %2548 = vmatpush1.bf16.msra.mxu0 0
      %2549 = vmatprep.subr.bf16.mxu0 0
      %2550 = vmatpush1.bf16.msra.mxu0 0
      %2551 = vmatprep.subr.bf16.mxu0 0
      %2552 = vmatpush1.bf16.msra.mxu0 %v2534
      %2553 = vmatprep.subr.bf16.mxu0 0
      %2554 = vmatpush1.bf16.msra.mxu0 %v2533
      %2555 = vmatprep.subr.bf16.mxu0 0
      %2556 = vmatpush1.bf16.msra.mxu0 %v2532
      %2557 = vmatprep.subr.bf16.mxu0 0
      %2558 = vmatpush1.bf16.msra.mxu0 %v2531
      %2559 = vmatprep.subr.bf16.mxu0 0
      %2560 = vmatpush2.bf16.msra.mxu0 0
      %2561 = vmatprep.subr.bf16.mxu0 0
      %2562 = vmatpush2.bf16.msra.mxu0 0
      %2563 = vmatprep.subr.bf16.mxu0 0
      %2564 = vmatpush2.bf16.msra.mxu0 0
      %2565 = vmatprep.subr.bf16.mxu0 0
      %2566 = vmatpush2.bf16.msra.mxu0 0
      %2567 = vmatprep.subr.bf16.mxu0 0
      %2568 = vmatpush2.bf16.msra.mxu0 0
      %2569 = vmatprep.subr.bf16.mxu0 0
      %2570 = vmatpush2.bf16.msra.mxu0 0
      %2571 = vmatprep.subr.bf16.mxu0 0
      %2572 = vmatpush2.bf16.msra.mxu0 0
      %2573 = vmatprep.subr.bf16.mxu0 0
      %2574 = vmatpush2.bf16.msra.mxu0 0
      %2575 = vmatprep.mubr.bf16.mxu0 0
      %2576 = vmatmul.mubr.bf16.gmra.mxu0 %v2541
      %v2577 = vpop.f32.mrf.mxu0
      %v2578 = vadd.f32 %v2513, %v2577
      %v2579 = vpop.f32.mrf.mxu0
      %v2580 = vpop.f32.mrf.mxu0
      %v2581 = vpop.f32.mrf.mxu0
      %2582 = vdwg.mxu0
      %vm2583 = vcmask 254976
      %2584 = vst.msk [vmem:[%s411] sm:$0x3] %vm2583, %v2578
      %p2585 = scmp.lt.s32.totalorder %s23, 1
      %s2586 = scalar_select %p2585, %s23, 1
      %s2587 = smul.addr %s2586, 2
      %s2588 = scalar_lea.vmem %s12, %s2587
      // Predicated region
      $region69: #{encoder_forward.1} parent=67 // pred_check
        %p2589 = pneg %p298
      $region70: #{encoder_forward.1} parent=67 // pred_check_branch
        %2591 = sbr.rel (%p2589) target = $region72
      $region71: #{encoder_forward.1} parent=67 // pred_region
        _
      $region72: #{encoder_forward.1} parent=67 // pred_fallthru
        _
    $region68: #{encoder_forward.1} parent=5 // pred_fallthru
      _
    %p2592 = scmp.le.s32.totalorder 2, %s18
    // Predicated region
    $region73: #{encoder_forward.1} parent=5 // pred_check
      %p2593 = pneg %p2592
    $region74: #{encoder_forward.1} parent=5 // pred_check_branch
      %2595 = sbr.rel (%p2593) target = $region76
    $region75: #{encoder_forward.1} parent=5 // pred_region
      %s2596 = ssub.s32 %s18, 2
      // Predicated region
      $region77: #{encoder_forward.1} parent=75 // pred_check
        %p2597 = pneg %p304
      $region78: #{encoder_forward.1} parent=75 // pred_check_branch
        %2599 = sbr.rel (%p2597) target = $region80
      $region79: #{encoder_forward.1} parent=75 // pred_region
        %p2600 = scmp.lt.s32.totalorder %s24, 1
        %s2601 = scalar_select %p2600, %s24, 1
        %s2602 = smul.addr %s2601, 2
        %s2603 = scalar_lea.vmem %s12, %s2602
      $region80: #{encoder_forward.1} parent=75 // pred_fallthru
        _
    $region76: #{encoder_forward.1} parent=5 // pred_fallthru
      _
  $region6: #{encoder_forward.1} parent=0 // loop_footer
    %s22 = sadd.s32 1, %s18
  $region7: #{encoder_forward.1} parent=0 // loop_footer_branch
    %17 = sbr.rel target = $region3
  $region8: #{encoder_forward.1} parent=0 // loop_exit
    _

</llo_original>
